<compile_context>
chip_gen: v6e
topology: v6e:2x2x1
jax: 0.10.0
libtpu: 0.0.40
codegen_flags: <defaults>
</compile_context>

<pallas_src>
import jax
import jax.numpy as jnp
import numpy as np
from jax import lax
from jax.experimental import pallas as pl
from jax.experimental.pallas import tpu as pltpu

KSIZE = 7
PAD = 3          # kernel_size=7 -> padding=3 (matches the PyTorch module)
LANE = 128


def _vmem_budget_bytes():
    """Per-generation VMEM budget: v7x (64 MiB/TC) -> 48 MiB, v5e/v6e (128 MiB) -> 96 MiB."""
    cap = 64 * 1024 * 1024  # conservative fallback
    try:
        info = pltpu.get_tpu_info()
        for name in ("vmem_capacity_bytes", "vmem_bytes", "vmem_size_bytes"):
            val = getattr(info, name, None)
            if val:
                cap = int(val)
                break
    except Exception:
        pass
    return min(cap * 3 // 4, 96 * 1024 * 1024)


def _choose_tiles(N, C, HWp, x_item, out_item, budget):
    """VMEM-budget / roofline driven (batch_block, channel_tile) selection."""
    sub = max(8, 32 // x_item)                   # sublane multiple (f32:8, bf16:16, int8:32)
    nb_cap = N if N <= 1 else -(-N // 2)         # >= 2 batch blocks when N >= 2 (v7x megacore)

    def vmem_use(nb, tc):
        x_buf = 2 * nb * tc * HWp * x_item       # double-buffered x tile
        out_buf = 2 * nb * HWp * out_item
        scratch = 2 * nb * HWp * 4               # running channel sum / max
        masks = 2 * 2 * KSIZE * HWp * 4          # border-mask table
        fin = 24 * nb * HWp * 4                  # finalize temporaries (7 col maps, acc, parts)
        return x_buf + out_buf + scratch + masks + fin

    def fits(nb, tc):
        return vmem_use(nb, tc) <= budget

    tc = C if C <= sub else (C // sub) * sub     # largest sublane-aligned tile <= C
    nb = min(nb_cap, 8)
    while not fits(nb, tc):
        if tc > sub:
            tc = max(sub, tc - sub)
        elif nb > 1:
            nb -= 1
        else:
            break
    # Grow the batch block while the x block is below the ~2 MiB HBM-roofline
    # sweet spot and the budget allows (bytes/step is the main HBM lever).
    target = 2 * 1024 * 1024
    while nb < nb_cap and nb * tc * HWp * x_item < target and fits(min(2 * nb, nb_cap), tc):
        nb = min(2 * nb, nb_cap)
    return nb, tc


def _border_masks(H, W, HWp):
    """(2*KSIZE, HWp) f32: rows 0..6 = per-dx SOURCE-column masks, rows 7..13 =
    per-dy OUTPUT-row masks.  Together they reproduce the conv's zero padding."""
    p = np.arange(HWp)
    row = p // W
    col = p % W
    m = np.zeros((2 * KSIZE, HWp), np.float32)
    for dx in range(KSIZE):
        lo, hi = max(0, dx - PAD), min(W, W + dx - PAD)
        m[dx] = ((col >= lo) & (col < hi)).astype(np.float32)
    for dy in range(KSIZE):
        lo, hi = max(0, PAD - dy), min(H, H + PAD - dy)
        m[KSIZE + dy] = ((row >= lo) & (row < hi)).astype(np.float32)
    m[:, H * W:] = 0.0        # lane-padding region never contributes
    return jnp.asarray(m)


def spatial_attention_pallas(x, w, *, batch_block=None, channel_tile=None):
    """x: (N, C, H, W); w: (1, 2, 7, 7) conv weight (no bias).  Returns (N, 1, H, W)."""
    N, C, H, W = x.shape
    HW = H * W
    HWp = -(-HW // LANE) * LANE
    x_item = jnp.dtype(x.dtype).itemsize
    budget = _vmem_budget_bytes()

    nb, tc = _choose_tiles(N, C, HWp, x_item, x_item, budget - 2 * 1024 * 1024)
    if batch_block is not None:
        nb = max(1, min(int(batch_block), N))
    if channel_tile is not None:
        tc = max(1, min(int(channel_tile), C))
    assert tc == C or tc % 8 == 0, "channel tile must equal C or be a multiple of 8"

    n_cs = pl.cdiv(C, tc)                        # channel grid steps (last may be ragged)
    ragged_c = (C % tc) != 0

    # Fold the mean's 1/C into the avg-channel weights (conv is linear) -> the
    # kernel only needs the running channel *sum*.
    scale = jnp.array([1.0 / C, 1.0], jnp.float32).reshape(1, 2, 1, 1)
    w_flat = (w.astype(jnp.float32) * scale).reshape(-1)           # (98,) scalars -> SMEM

    masks = _border_masks(H, W, HWp)                                # (14, HWp) f32 -> VMEM

    x_flat = x.reshape(N, C, HW)
    if HWp != HW:
        x_flat = jnp.pad(x_flat, ((0, 0), (0, 0), (0, HWp - HW)))

    # Statically drop taps whose border mask is empty (only matters for H or W <= 3).
    dys = [dy for dy in range(KSIZE) if max(0, PAD - dy) < min(H, H + PAD - dy)]
    dxs = [dx for dx in range(KSIZE) if max(0, dx - PAD) < min(W, W + dx - PAD)]

    def kernel(w_ref, m_ref, x_ref, o_ref, sum_ref, max_ref):
        kc = pl.program_id(1)

        # ---- streaming phase: partial channel reduction of this (nb, tc, HWp) tile ----
        xb = x_ref[...]
        if ragged_c:
            ch = lax.broadcasted_iota(jnp.int32, xb.shape, 1)
            valid = ch < (C - kc * tc)             # only the last channel tile is ragged
            part_sum = jnp.sum(jnp.where(valid, xb, 0), axis=1, dtype=jnp.float32)
            neg = jnp.asarray(-jnp.inf, xb.dtype)
            part_max = jnp.max(jnp.where(valid, xb, neg), axis=1).astype(jnp.float32)
        else:
            part_sum = jnp.sum(xb, axis=1, dtype=jnp.float32)
            part_max = jnp.max(xb, axis=1).astype(jnp.float32)

        @pl.when(kc == 0)
        def _():
            sum_ref[...] = part_sum
            max_ref[...] = part_max

        @pl.when(kc != 0)
        def _():
            sum_ref[...] = sum_ref[...] + part_sum
            max_ref[...] = jnp.maximum(max_ref[...], part_max)

        # ---- finalize: 7x7 conv (roll + MAC) + sigmoid, once per batch block ----
        @pl.when(kc == n_cs - 1)
        def _():
            # Stack the two reduced maps along sublanes: ONE roll per tap moves both.
            stacked = jnp.concatenate([sum_ref[...], max_ref[...]], axis=0)   # (2nb, HWp)

            # Pre-apply the per-dx SOURCE-column border mask once (hoisted out of taps).
            cmaps = []
            for dx in dxs:
                cmask = m_ref[dx:dx + 1, :] != 0.0                            # (1, HWp)
                cmaps.append(jnp.where(cmask, stacked, 0.0))

            # sublane < nb -> avg half, else max half (per-tap weight columns).
            is_avg = lax.broadcasted_iota(jnp.int32, (2 * nb, 1), 0) < nb

            acc = jnp.zeros((2 * nb, HWp), jnp.float32)
            for dy in dys:
                part0 = jnp.zeros((2 * nb, HWp), jnp.float32)   # two accumulators for ILP
                part1 = jnp.zeros((2 * nb, HWp), jnp.float32)
                for t, dx in enumerate(dxs):
                    s = (dy - PAD) * W + (dx - PAD)             # flat source offset of tap
                    shift = (-s) % HWp
                    rt = pltpu.roll(cmaps[t], shift=shift, axis=1) if shift else cmaps[t]
                    w_a = w_ref[0 * KSIZE * KSIZE + dy * KSIZE + dx]
                    w_m = w_ref[1 * KSIZE * KSIZE + dy * KSIZE + dx]
                    w_col = jnp.where(is_avg, w_a, w_m)         # (2nb, 1)
                    if t & 1:
                        part1 = part1 + rt * w_col
                    else:
                        part0 = part0 + rt * w_col
                # Row border mask hoisted: one select per dy on the per-dy partial.
                rmask = m_ref[KSIZE + dy:KSIZE + dy + 1, :] != 0.0
                acc = acc + jnp.where(rmask, part0 + part1, 0.0)

            conv = acc[:nb, :] + acc[nb:, :]                    # fold avg/max halves (once)
            o_ref[:, 0, :] = jax.nn.sigmoid(conv).astype(o_ref.dtype)

    grid = (pl.cdiv(N, nb), n_cs)
    out = pl.pallas_call(
        kernel,
        out_shape=jax.ShapeDtypeStruct((N, 1, HWp), x.dtype),
        grid_spec=pltpu.PrefetchScalarGridSpec(
            num_scalar_prefetch=0,
            grid=grid,
            in_specs=[
                pl.BlockSpec(memory_space=pltpu.MemorySpace.SMEM),        # conv weights (scalars)
                pl.BlockSpec((2 * KSIZE, HWp), lambda b, k: (0, 0)),      # border-mask table
                pl.BlockSpec((nb, tc, HWp), lambda b, k: (b, k, 0)),      # x tile
                # For very large HW on v7x (small forced blocks), pl.Buffered(3) on the
                # x spec can hide DMA issue latency; left at the default 2-deep here.
            ],
            out_specs=pl.BlockSpec((nb, 1, HWp), lambda b, k: (b, 0, 0)),  # lane-dense output
            scratch_shapes=[
                pltpu.VMEM((nb, HWp), jnp.float32),   # running channel sum
                pltpu.VMEM((nb, HWp), jnp.float32),   # running channel max
            ],
        ),
        compiler_params=pltpu.CompilerParams(
            dimension_semantics=("parallel", "arbitrary"),
            vmem_limit_bytes=budget,
        ),
    )(w_flat, masks, x_flat)

    out = out[..., :HW] if HWp != HW else out
    return out.reshape(N, 1, H, W)


def spatial_attention_ref(x, w):
    """Pure-JAX reference matching the PyTorch module."""
    avg = jnp.mean(x, axis=1, keepdims=True)
    mx = jnp.max(x, axis=1, keepdims=True)
    cat = jnp.concatenate([avg, mx], axis=1)                     # (N, 2, H, W)
    y = lax.conv_general_dilated(
        cat, w, window_strides=(1, 1), padding=[(PAD, PAD), (PAD, PAD)],
        dimension_numbers=("NCHW", "OIHW", "NCHW"),
        precision=lax.Precision.HIGHEST)
    return jax.nn.sigmoid(y)


if __name__ == "__main__":
    key = jax.random.PRNGKey(0)
    kx1, kx2, kw = jax.random.split(key, 3)

    fan_in = 2 * KSIZE * KSIZE
    bound = 1.0 / np.sqrt(fan_in)
    w = jax.random.uniform(kw, (1, 2, KSIZE, KSIZE),
                           minval=-bound, maxval=bound, dtype=jnp.float32)

    # Test 1: aligned shapes, auto-chosen tiles (>=2 blocks on the parallel batch axis).
    x1 = jax.random.normal(kx1, (2, 16, 16, 16), dtype=jnp.float32)
    out1 = jax.block_until_ready(spatial_attention_pallas(x1, w))
    ref1 = jax.block_until_ready(spatial_attention_ref(x1, w))
    assert out1.shape == (2, 1, 16, 16)
    np.testing.assert_allclose(np.asarray(out1), np.asarray(ref1), rtol=1e-5, atol=1e-5)

    # Test 2: ragged everything — C=20 with channel_tile=8 (ragged last channel tile,
    # multi-step accumulation), N=3 (ragged batch block), HW=16*20=320 (lane-padded to 384).
    x2 = jax.random.normal(kx2, (3, 20, 16, 20), dtype=jnp.float32)
    out2 = jax.block_until_ready(spatial_attention_pallas(x2, w, channel_tile=8))
    ref2 = jax.block_until_ready(spatial_attention_ref(x2, w))
    assert out2.shape == (3, 1, 16, 20)
    np.testing.assert_allclose(np.asarray(out2), np.asarray(ref2), rtol=1e-5, atol=1e-5)

    print("KERNEL_OK")
</pallas_src>

<mosaic_0001>
module attributes {stable_mosaic.version = 11 : i64} {
  func.func @kernel(%arg0: i32, %arg1: i32, %arg2: memref<98xf32, #tpu.memory_space<smem>>, %arg3: memref<14x256xf32, #tpu.memory_space<vmem>>, %arg4: memref<1x16x256xf32, #tpu.memory_space<vmem>>, %arg5: memref<1x1x256xf32, #tpu.memory_space<vmem>>, %arg6: memref<1x256xf32, #tpu.memory_space<vmem>>, %arg7: memref<1x256xf32, #tpu.memory_space<vmem>>) attributes {dimension_semantics = [#tpu.dimension_semantics<parallel>, #tpu.dimension_semantics<arbitrary>], iteration_bounds = array<i64: 2, 1>, scalar_prefetch = 0 : i64, scratch_operands = 2 : i64, tpu.core_type = #tpu.core_type<tc>, window_params = [{transform_indices = @transform_0, window_bounds = array<i64: 98>}, {pipeline_mode = #tpu.pipeline_mode<synchronous>, transform_indices = @transform_1, window_bounds = array<i64: 14, 256>}, {transform_indices = @transform_2, window_bounds = array<i64: 1, 16, 256>}, {transform_indices = @transform_3, window_bounds = array<i64: 1, 1, 256>}]} {
    %c0 = arith.constant 0 : index
    %c0_0 = arith.constant 0 : index
    %c0_1 = arith.constant 0 : index
    %0 = vector.load %arg4[%c0, %c0_0, %c0_1] : memref<1x16x256xf32, #tpu.memory_space<vmem>>, vector<1x16x256xf32>
    %cst = arith.constant dense<0.000000e+00> : vector<1x256xf32>
    %1 = vector.multi_reduction <add>, %0, %cst [1] : vector<1x16x256xf32> to vector<1x256xf32>
    %cst_2 = arith.constant dense<0xFF800000> : vector<1x256xf32>
    %2 = vector.multi_reduction <maximumf>, %0, %cst_2 [1] : vector<1x16x256xf32> to vector<1x256xf32>
    %c0_i32 = arith.constant 0 : i32
    %3 = arith.cmpi eq, %arg1, %c0_i32 : i32
    %4 = arith.extui %3 : i1 to i32
    %c0_i32_3 = arith.constant 0 : i32
    %5 = arith.cmpi ne, %4, %c0_i32_3 : i32
    scf.if %5 {
      %c0_8 = arith.constant 0 : index
      %c0_9 = arith.constant 0 : index
      %12 = vector.load %arg6[%c0_8, %c0_9] : memref<1x256xf32, #tpu.memory_space<vmem>>, vector<1x256xf32>
      tpu.vector_store %arg6[%c0_8, %c0_9], %1 {strides = array<i32>} : memref<1x256xf32, #tpu.memory_space<vmem>>, vector<1x256xf32>,
      %c0_10 = arith.constant 0 : index
      %c0_11 = arith.constant 0 : index
      %13 = vector.load %arg7[%c0_10, %c0_11] : memref<1x256xf32, #tpu.memory_space<vmem>>, vector<1x256xf32>
      tpu.vector_store %arg7[%c0_10, %c0_11], %2 {strides = array<i32>} : memref<1x256xf32, #tpu.memory_space<vmem>>, vector<1x256xf32>,
    } else {
    }
    %c0_i32_4 = arith.constant 0 : i32
    %6 = arith.cmpi ne, %arg1, %c0_i32_4 : i32
    %7 = arith.extui %6 : i1 to i32
    %c0_i32_5 = arith.constant 0 : i32
    %8 = arith.cmpi ne, %7, %c0_i32_5 : i32
    scf.if %8 {
      %c0_8 = arith.constant 0 : index
      %c0_9 = arith.constant 0 : index
      %12 = vector.load %arg6[%c0_8, %c0_9] : memref<1x256xf32, #tpu.memory_space<vmem>>, vector<1x256xf32>
      %13 = arith.addf %12, %1 : vector<1x256xf32>
      %c0_10 = arith.constant 0 : index
      %c0_11 = arith.constant 0 : index
      %14 = vector.load %arg6[%c0_10, %c0_11] : memref<1x256xf32, #tpu.memory_space<vmem>>, vector<1x256xf32>
      tpu.vector_store %arg6[%c0_10, %c0_11], %13 {strides = array<i32>} : memref<1x256xf32, #tpu.memory_space<vmem>>, vector<1x256xf32>,
      %c0_12 = arith.constant 0 : index
      %c0_13 = arith.constant 0 : index
      %15 = vector.load %arg7[%c0_12, %c0_13] : memref<1x256xf32, #tpu.memory_space<vmem>>, vector<1x256xf32>
      %16 = arith.maximumf %15, %2 : vector<1x256xf32>
      %c0_14 = arith.constant 0 : index
      %c0_15 = arith.constant 0 : index
      %17 = vector.load %arg7[%c0_14, %c0_15] : memref<1x256xf32, #tpu.memory_space<vmem>>, vector<1x256xf32>
      tpu.vector_store %arg7[%c0_14, %c0_15], %16 {strides = array<i32>} : memref<1x256xf32, #tpu.memory_space<vmem>>, vector<1x256xf32>,
    } else {
    }
    %c0_i32_6 = arith.constant 0 : i32
    %9 = arith.cmpi eq, %arg1, %c0_i32_6 : i32
    %10 = arith.extui %9 : i1 to i32
    %c0_i32_7 = arith.constant 0 : i32
    %11 = arith.cmpi ne, %10, %c0_i32_7 : i32
    scf.if %11 {
      %c0_8 = arith.constant 0 : index
      %c0_9 = arith.constant 0 : index
      %12 = vector.load %arg6[%c0_8, %c0_9] : memref<1x256xf32, #tpu.memory_space<vmem>>, vector<1x256xf32>
      %c0_10 = arith.constant 0 : index
      %c0_11 = arith.constant 0 : index
      %13 = vector.load %arg7[%c0_10, %c0_11] : memref<1x256xf32, #tpu.memory_space<vmem>>, vector<1x256xf32>
      %14 = tpu.concatenate %12, %13 in 0 : vector<1x256xf32>, vector<1x256xf32> -> vector<2x256xf32>
      %c0_12 = arith.constant 0 : index
      %c0_13 = arith.constant 0 : index
      %15 = vector.load %arg3[%c0_12, %c0_13] : memref<14x256xf32, #tpu.memory_space<vmem>>, vector<1x256xf32>
      %cst_14 = arith.constant 0.000000e+00 : f32
      %16 = vector.broadcast %cst_14 : f32 to vector<1x256xf32>
      %17 = arith.cmpf one, %15, %16 : vector<1x256xf32>
      %cst_15 = arith.constant 0.000000e+00 : f32
      %18 = vector.shape_cast %17 : vector<1x256xi1> to vector<1x256xi1>
      %19 = vector.broadcast %18 : vector<1x256xi1> to vector<2x256xi1>
      %20 = vector.broadcast %cst_15 : f32 to vector<2x256xf32>
      %21 = arith.select %19, %14, %20 : vector<2x256xi1>, vector<2x256xf32>
      %c1 = arith.constant 1 : index
      %c0_16 = arith.constant 0 : index
      %22 = vector.load %arg3[%c1, %c0_16] : memref<14x256xf32, #tpu.memory_space<vmem>>, vector<1x256xf32>
      %cst_17 = arith.constant 0.000000e+00 : f32
      %23 = vector.broadcast %cst_17 : f32 to vector<1x256xf32>
      %24 = arith.cmpf one, %22, %23 : vector<1x256xf32>
      %cst_18 = arith.constant 0.000000e+00 : f32
      %25 = vector.shape_cast %24 : vector<1x256xi1> to vector<1x256xi1>
      %26 = vector.broadcast %25 : vector<1x256xi1> to vector<2x256xi1>
      %27 = vector.broadcast %cst_18 : f32 to vector<2x256xf32>
      %28 = arith.select %26, %14, %27 : vector<2x256xi1>, vector<2x256xf32>
      %c2 = arith.constant 2 : index
      %c0_19 = arith.constant 0 : index
      %29 = vector.load %arg3[%c2, %c0_19] : memref<14x256xf32, #tpu.memory_space<vmem>>, vector<1x256xf32>
      %cst_20 = arith.constant 0.000000e+00 : f32
      %30 = vector.broadcast %cst_20 : f32 to vector<1x256xf32>
      %31 = arith.cmpf one, %29, %30 : vector<1x256xf32>
      %cst_21 = arith.constant 0.000000e+00 : f32
      %32 = vector.shape_cast %31 : vector<1x256xi1> to vector<1x256xi1>
      %33 = vector.broadcast %32 : vector<1x256xi1> to vector<2x256xi1>
      %34 = vector.broadcast %cst_21 : f32 to vector<2x256xf32>
      %35 = arith.select %33, %14, %34 : vector<2x256xi1>, vector<2x256xf32>
      %c3 = arith.constant 3 : index
      %c0_22 = arith.constant 0 : index
      %36 = vector.load %arg3[%c3, %c0_22] : memref<14x256xf32, #tpu.memory_space<vmem>>, vector<1x256xf32>
      %cst_23 = arith.constant 0.000000e+00 : f32
      %37 = vector.broadcast %cst_23 : f32 to vector<1x256xf32>
      %38 = arith.cmpf one, %36, %37 : vector<1x256xf32>
      %cst_24 = arith.constant 0.000000e+00 : f32
      %39 = vector.shape_cast %38 : vector<1x256xi1> to vector<1x256xi1>
      %40 = vector.broadcast %39 : vector<1x256xi1> to vector<2x256xi1>
      %41 = vector.broadcast %cst_24 : f32 to vector<2x256xf32>
      %42 = arith.select %40, %14, %41 : vector<2x256xi1>, vector<2x256xf32>
      %c4 = arith.constant 4 : index
      %c0_25 = arith.constant 0 : index
      %43 = vector.load %arg3[%c4, %c0_25] : memref<14x256xf32, #tpu.memory_space<vmem>>, vector<1x256xf32>
      %cst_26 = arith.constant 0.000000e+00 : f32
      %44 = vector.broadcast %cst_26 : f32 to vector<1x256xf32>
      %45 = arith.cmpf one, %43, %44 : vector<1x256xf32>
      %cst_27 = arith.constant 0.000000e+00 : f32
      %46 = vector.shape_cast %45 : vector<1x256xi1> to vector<1x256xi1>
      %47 = vector.broadcast %46 : vector<1x256xi1> to vector<2x256xi1>
      %48 = vector.broadcast %cst_27 : f32 to vector<2x256xf32>
      %49 = arith.select %47, %14, %48 : vector<2x256xi1>, vector<2x256xf32>
      %c5 = arith.constant 5 : index
      %c0_28 = arith.constant 0 : index
      %50 = vector.load %arg3[%c5, %c0_28] : memref<14x256xf32, #tpu.memory_space<vmem>>, vector<1x256xf32>
      %cst_29 = arith.constant 0.000000e+00 : f32
      %51 = vector.broadcast %cst_29 : f32 to vector<1x256xf32>
      %52 = arith.cmpf one, %50, %51 : vector<1x256xf32>
      %cst_30 = arith.constant 0.000000e+00 : f32
      %53 = vector.shape_cast %52 : vector<1x256xi1> to vector<1x256xi1>
      %54 = vector.broadcast %53 : vector<1x256xi1> to vector<2x256xi1>
      %55 = vector.broadcast %cst_30 : f32 to vector<2x256xf32>
      %56 = arith.select %54, %14, %55 : vector<2x256xi1>, vector<2x256xf32>
      %c6 = arith.constant 6 : index
      %c0_31 = arith.constant 0 : index
      %57 = vector.load %arg3[%c6, %c0_31] : memref<14x256xf32, #tpu.memory_space<vmem>>, vector<1x256xf32>
      %cst_32 = arith.constant 0.000000e+00 : f32
      %58 = vector.broadcast %cst_32 : f32 to vector<1x256xf32>
      %59 = arith.cmpf one, %57, %58 : vector<1x256xf32>
      %cst_33 = arith.constant 0.000000e+00 : f32
      %60 = vector.shape_cast %59 : vector<1x256xi1> to vector<1x256xi1>
      %61 = vector.broadcast %60 : vector<1x256xi1> to vector<2x256xi1>
      %62 = vector.broadcast %cst_33 : f32 to vector<2x256xf32>
      %63 = arith.select %61, %14, %62 : vector<2x256xi1>, vector<2x256xf32>
      %64 = tpu.iota {dimensions = array<i32: 0>} : vector<2x1xi32>
      %c1_i32 = arith.constant 1 : i32
      %65 = vector.broadcast %c1_i32 : i32 to vector<2x1xi32>
      %66 = arith.cmpi slt, %64, %65 : vector<2x1xi32>
      %cst_34 = arith.constant 0.000000e+00 : f32
      %67 = vector.broadcast %cst_34 : f32 to vector<2x256xf32>
      %cst_35 = arith.constant 0.000000e+00 : f32
      %68 = vector.broadcast %cst_35 : f32 to vector<2x256xf32>
      %cst_36 = arith.constant 0.000000e+00 : f32
      %69 = vector.broadcast %cst_36 : f32 to vector<2x256xf32>
      %c51_i32 = arith.constant 51 : i32
      %70 = tpu.dynamic_rotate %21 by %c51_i32 dim 1 : vector<2x256xf32>, i32 -> vector<2x256xf32>
      %c0_37 = arith.constant 0 : index
      %71 = memref.load %arg2[%c0_37] : memref<98xf32, #tpu.memory_space<smem>>
      %c49 = arith.constant 49 : index
      %72 = memref.load %arg2[%c49] : memref<98xf32, #tpu.memory_space<smem>>
      %73 = vector.broadcast %71 : f32 to vector<2x1xf32>
      %74 = vector.broadcast %72 : f32 to vector<2x1xf32>
      %75 = arith.select %66, %73, %74 : vector<2x1xi1>, vector<2x1xf32>
      %76 = vector.broadcast %75 : vector<2x1xf32> to vector<2x256xf32>
      %77 = arith.mulf %70, %76 : vector<2x256xf32>
      %78 = arith.addf %68, %77 : vector<2x256xf32>
      %c50_i32 = arith.constant 50 : i32
      %79 = tpu.dynamic_rotate %28 by %c50_i32 dim 1 : vector<2x256xf32>, i32 -> vector<2x256xf32>
      %c1_38 = arith.constant 1 : index
      %80 = memref.load %arg2[%c1_38] : memref<98xf32, #tpu.memory_space<smem>>
      %c50 = arith.constant 50 : index
      %81 = memref.load %arg2[%c50] : memref<98xf32, #tpu.memory_space<smem>>
      %82 = vector.broadcast %80 : f32 to vector<2x1xf32>
      %83 = vector.broadcast %81 : f32 to vector<2x1xf32>
      %84 = arith.select %66, %82, %83 : vector<2x1xi1>, vector<2x1xf32>
      %85 = vector.broadcast %84 : vector<2x1xf32> to vector<2x256xf32>
      %86 = arith.mulf %79, %85 : vector<2x256xf32>
      %87 = arith.addf %69, %86 : vector<2x256xf32>
      %c49_i32 = arith.constant 49 : i32
      %88 = tpu.dynamic_rotate %35 by %c49_i32 dim 1 : vector<2x256xf32>, i32 -> vector<2x256xf32>
      %c2_39 = arith.constant 2 : index
      %89 = memref.load %arg2[%c2_39] : memref<98xf32, #tpu.memory_space<smem>>
      %c51 = arith.constant 51 : index
      %90 = memref.load %arg2[%c51] : memref<98xf32, #tpu.memory_space<smem>>
      %91 = vector.broadcast %89 : f32 to vector<2x1xf32>
      %92 = vector.broadcast %90 : f32 to vector<2x1xf32>
      %93 = arith.select %66, %91, %92 : vector<2x1xi1>, vector<2x1xf32>
      %94 = vector.broadcast %93 : vector<2x1xf32> to vector<2x256xf32>
      %95 = arith.mulf %88, %94 : vector<2x256xf32>
      %96 = arith.addf %78, %95 : vector<2x256xf32>
      %c48_i32 = arith.constant 48 : i32
      %97 = tpu.dynamic_rotate %42 by %c48_i32 dim 1 : vector<2x256xf32>, i32 -> vector<2x256xf32>
      %c3_40 = arith.constant 3 : index
      %98 = memref.load %arg2[%c3_40] : memref<98xf32, #tpu.memory_space<smem>>
      %c52 = arith.constant 52 : index
      %99 = memref.load %arg2[%c52] : memref<98xf32, #tpu.memory_space<smem>>
      %100 = vector.broadcast %98 : f32 to vector<2x1xf32>
      %101 = vector.broadcast %99 : f32 to vector<2x1xf32>
      %102 = arith.select %66, %100, %101 : vector<2x1xi1>, vector<2x1xf32>
      %103 = vector.broadcast %102 : vector<2x1xf32> to vector<2x256xf32>
      %104 = arith.mulf %97, %103 : vector<2x256xf32>
      %105 = arith.addf %87, %104 : vector<2x256xf32>
      %c47_i32 = arith.constant 47 : i32
      %106 = tpu.dynamic_rotate %49 by %c47_i32 dim 1 : vector<2x256xf32>, i32 -> vector<2x256xf32>
      %c4_41 = arith.constant 4 : index
      %107 = memref.load %arg2[%c4_41] : memref<98xf32, #tpu.memory_space<smem>>
      %c53 = arith.constant 53 : index
      %108 = memref.load %arg2[%c53] : memref<98xf32, #tpu.memory_space<smem>>
      %109 = vector.broadcast %107 : f32 to vector<2x1xf32>
      %110 = vector.broadcast %108 : f32 to vector<2x1xf32>
      %111 = arith.select %66, %109, %110 : vector<2x1xi1>, vector<2x1xf32>
      %112 = vector.broadcast %111 : vector<2x1xf32> to vector<2x256xf32>
      %113 = arith.mulf %106, %112 : vector<2x256xf32>
      %114 = arith.addf %96, %113 : vector<2x256xf32>
      %c46_i32 = arith.constant 46 : i32
      %115 = tpu.dynamic_rotate %56 by %c46_i32 dim 1 : vector<2x256xf32>, i32 -> vector<2x256xf32>
      %c5_42 = arith.constant 5 : index
      %116 = memref.load %arg2[%c5_42] : memref<98xf32, #tpu.memory_space<smem>>
      %c54 = arith.constant 54 : index
      %117 = memref.load %arg2[%c54] : memref<98xf32, #tpu.memory_space<smem>>
      %118 = vector.broadcast %116 : f32 to vector<2x1xf32>
      %119 = vector.broadcast %117 : f32 to vector<2x1xf32>
      %120 = arith.select %66, %118, %119 : vector<2x1xi1>, vector<2x1xf32>
      %121 = vector.broadcast %120 : vector<2x1xf32> to vector<2x256xf32>
      %122 = arith.mulf %115, %121 : vector<2x256xf32>
      %123 = arith.addf %105, %122 : vector<2x256xf32>
      %c45_i32 = arith.constant 45 : i32
      %124 = tpu.dynamic_rotate %63 by %c45_i32 dim 1 : vector<2x256xf32>, i32 -> vector<2x256xf32>
      %c6_43 = arith.constant 6 : index
      %125 = memref.load %arg2[%c6_43] : memref<98xf32, #tpu.memory_space<smem>>
      %c55 = arith.constant 55 : index
      %126 = memref.load %arg2[%c55] : memref<98xf32, #tpu.memory_space<smem>>
      %127 = vector.broadcast %125 : f32 to vector<2x1xf32>
      %128 = vector.broadcast %126 : f32 to vector<2x1xf32>
      %129 = arith.select %66, %127, %128 : vector<2x1xi1>, vector<2x1xf32>
      %130 = vector.broadcast %129 : vector<2x1xf32> to vector<2x256xf32>
      %131 = arith.mulf %124, %130 : vector<2x256xf32>
      %132 = arith.addf %114, %131 : vector<2x256xf32>
      %c7 = arith.constant 7 : index
      %c0_44 = arith.constant 0 : index
      %133 = vector.load %arg3[%c7, %c0_44] : memref<14x256xf32, #tpu.memory_space<vmem>>, vector<1x256xf32>
      %cst_45 = arith.constant 0.000000e+00 : f32
      %134 = vector.broadcast %cst_45 : f32 to vector<1x256xf32>
      %135 = arith.cmpf one, %133, %134 : vector<1x256xf32>
      %136 = arith.addf %132, %123 : vector<2x256xf32>
      %cst_46 = arith.constant 0.000000e+00 : f32
      %137 = vector.shape_cast %135 : vector<1x256xi1> to vector<1x256xi1>
      %138 = vector.broadcast %137 : vector<1x256xi1> to vector<2x256xi1>
      %139 = vector.broadcast %cst_46 : f32 to vector<2x256xf32>
      %140 = arith.select %138, %136, %139 : vector<2x256xi1>, vector<2x256xf32>
      %141 = arith.addf %67, %140 : vector<2x256xf32>
      %cst_47 = arith.constant 0.000000e+00 : f32
      %142 = vector.broadcast %cst_47 : f32 to vector<2x256xf32>
      %cst_48 = arith.constant 0.000000e+00 : f32
      %143 = vector.broadcast %cst_48 : f32 to vector<2x256xf32>
      %c35_i32 = arith.constant 35 : i32
      %144 = tpu.dynamic_rotate %21 by %c35_i32 dim 1 : vector<2x256xf32>, i32 -> vector<2x256xf32>
      %c7_49 = arith.constant 7 : index
      %145 = memref.load %arg2[%c7_49] : memref<98xf32, #tpu.memory_space<smem>>
      %c56 = arith.constant 56 : index
      %146 = memref.load %arg2[%c56] : memref<98xf32, #tpu.memory_space<smem>>
      %147 = vector.broadcast %145 : f32 to vector<2x1xf32>
      %148 = vector.broadcast %146 : f32 to vector<2x1xf32>
      %149 = arith.select %66, %147, %148 : vector<2x1xi1>, vector<2x1xf32>
      %150 = vector.broadcast %149 : vector<2x1xf32> to vector<2x256xf32>
      %151 = arith.mulf %144, %150 : vector<2x256xf32>
      %152 = arith.addf %142, %151 : vector<2x256xf32>
      %c34_i32 = arith.constant 34 : i32
      %153 = tpu.dynamic_rotate %28 by %c34_i32 dim 1 : vector<2x256xf32>, i32 -> vector<2x256xf32>
      %c8 = arith.constant 8 : index
      %154 = memref.load %arg2[%c8] : memref<98xf32, #tpu.memory_space<smem>>
      %c57 = arith.constant 57 : index
      %155 = memref.load %arg2[%c57] : memref<98xf32, #tpu.memory_space<smem>>
      %156 = vector.broadcast %154 : f32 to vector<2x1xf32>
      %157 = vector.broadcast %155 : f32 to vector<2x1xf32>
      %158 = arith.select %66, %156, %157 : vector<2x1xi1>, vector<2x1xf32>
      %159 = vector.broadcast %158 : vector<2x1xf32> to vector<2x256xf32>
      %160 = arith.mulf %153, %159 : vector<2x256xf32>
      %161 = arith.addf %143, %160 : vector<2x256xf32>
      %c33_i32 = arith.constant 33 : i32
      %162 = tpu.dynamic_rotate %35 by %c33_i32 dim 1 : vector<2x256xf32>, i32 -> vector<2x256xf32>
      %c9 = arith.constant 9 : index
      %163 = memref.load %arg2[%c9] : memref<98xf32, #tpu.memory_space<smem>>
      %c58 = arith.constant 58 : index
      %164 = memref.load %arg2[%c58] : memref<98xf32, #tpu.memory_space<smem>>
      %165 = vector.broadcast %163 : f32 to vector<2x1xf32>
      %166 = vector.broadcast %164 : f32 to vector<2x1xf32>
      %167 = arith.select %66, %165, %166 : vector<2x1xi1>, vector<2x1xf32>
      %168 = vector.broadcast %167 : vector<2x1xf32> to vector<2x256xf32>
      %169 = arith.mulf %162, %168 : vector<2x256xf32>
      %170 = arith.addf %152, %169 : vector<2x256xf32>
      %c32_i32 = arith.constant 32 : i32
      %171 = tpu.dynamic_rotate %42 by %c32_i32 dim 1 : vector<2x256xf32>, i32 -> vector<2x256xf32>
      %c10 = arith.constant 10 : index
      %172 = memref.load %arg2[%c10] : memref<98xf32, #tpu.memory_space<smem>>
      %c59 = arith.constant 59 : index
      %173 = memref.load %arg2[%c59] : memref<98xf32, #tpu.memory_space<smem>>
      %174 = vector.broadcast %172 : f32 to vector<2x1xf32>
      %175 = vector.broadcast %173 : f32 to vector<2x1xf32>
      %176 = arith.select %66, %174, %175 : vector<2x1xi1>, vector<2x1xf32>
      %177 = vector.broadcast %176 : vector<2x1xf32> to vector<2x256xf32>
      %178 = arith.mulf %171, %177 : vector<2x256xf32>
      %179 = arith.addf %161, %178 : vector<2x256xf32>
      %c31_i32 = arith.constant 31 : i32
      %180 = tpu.dynamic_rotate %49 by %c31_i32 dim 1 : vector<2x256xf32>, i32 -> vector<2x256xf32>
      %c11 = arith.constant 11 : index
      %181 = memref.load %arg2[%c11] : memref<98xf32, #tpu.memory_space<smem>>
      %c60 = arith.constant 60 : index
      %182 = memref.load %arg2[%c60] : memref<98xf32, #tpu.memory_space<smem>>
      %183 = vector.broadcast %181 : f32 to vector<2x1xf32>
      %184 = vector.broadcast %182 : f32 to vector<2x1xf32>
      %185 = arith.select %66, %183, %184 : vector<2x1xi1>, vector<2x1xf32>
      %186 = vector.broadcast %185 : vector<2x1xf32> to vector<2x256xf32>
      %187 = arith.mulf %180, %186 : vector<2x256xf32>
      %188 = arith.addf %170, %187 : vector<2x256xf32>
      %c30_i32 = arith.constant 30 : i32
      %189 = tpu.dynamic_rotate %56 by %c30_i32 dim 1 : vector<2x256xf32>, i32 -> vector<2x256xf32>
      %c12 = arith.constant 12 : index
      %190 = memref.load %arg2[%c12] : memref<98xf32, #tpu.memory_space<smem>>
      %c61 = arith.constant 61 : index
      %191 = memref.load %arg2[%c61] : memref<98xf32, #tpu.memory_space<smem>>
      %192 = vector.broadcast %190 : f32 to vector<2x1xf32>
      %193 = vector.broadcast %191 : f32 to vector<2x1xf32>
      %194 = arith.select %66, %192, %193 : vector<2x1xi1>, vector<2x1xf32>
      %195 = vector.broadcast %194 : vector<2x1xf32> to vector<2x256xf32>
      %196 = arith.mulf %189, %195 : vector<2x256xf32>
      %197 = arith.addf %179, %196 : vector<2x256xf32>
      %c29_i32 = arith.constant 29 : i32
      %198 = tpu.dynamic_rotate %63 by %c29_i32 dim 1 : vector<2x256xf32>, i32 -> vector<2x256xf32>
      %c13 = arith.constant 13 : index
      %199 = memref.load %arg2[%c13] : memref<98xf32, #tpu.memory_space<smem>>
      %c62 = arith.constant 62 : index
      %200 = memref.load %arg2[%c62] : memref<98xf32, #tpu.memory_space<smem>>
      %201 = vector.broadcast %199 : f32 to vector<2x1xf32>
      %202 = vector.broadcast %200 : f32 to vector<2x1xf32>
      %203 = arith.select %66, %201, %202 : vector<2x1xi1>, vector<2x1xf32>
      %204 = vector.broadcast %203 : vector<2x1xf32> to vector<2x256xf32>
      %205 = arith.mulf %198, %204 : vector<2x256xf32>
      %206 = arith.addf %188, %205 : vector<2x256xf32>
      %c8_50 = arith.constant 8 : index
      %c0_51 = arith.constant 0 : index
      %207 = vector.load %arg3[%c8_50, %c0_51] : memref<14x256xf32, #tpu.memory_space<vmem>>, vector<1x256xf32>
      %cst_52 = arith.constant 0.000000e+00 : f32
      %208 = vector.broadcast %cst_52 : f32 to vector<1x256xf32>
      %209 = arith.cmpf one, %207, %208 : vector<1x256xf32>
      %210 = arith.addf %206, %197 : vector<2x256xf32>
      %cst_53 = arith.constant 0.000000e+00 : f32
      %211 = vector.shape_cast %209 : vector<1x256xi1> to vector<1x256xi1>
      %212 = vector.broadcast %211 : vector<1x256xi1> to vector<2x256xi1>
      %213 = vector.broadcast %cst_53 : f32 to vector<2x256xf32>
      %214 = arith.select %212, %210, %213 : vector<2x256xi1>, vector<2x256xf32>
      %215 = arith.addf %141, %214 : vector<2x256xf32>
      %cst_54 = arith.constant 0.000000e+00 : f32
      %216 = vector.broadcast %cst_54 : f32 to vector<2x256xf32>
      %cst_55 = arith.constant 0.000000e+00 : f32
      %217 = vector.broadcast %cst_55 : f32 to vector<2x256xf32>
      %c19_i32 = arith.constant 19 : i32
      %218 = tpu.dynamic_rotate %21 by %c19_i32 dim 1 : vector<2x256xf32>, i32 -> vector<2x256xf32>
      %c14 = arith.constant 14 : index
      %219 = memref.load %arg2[%c14] : memref<98xf32, #tpu.memory_space<smem>>
      %c63 = arith.constant 63 : index
      %220 = memref.load %arg2[%c63] : memref<98xf32, #tpu.memory_space<smem>>
      %221 = vector.broadcast %219 : f32 to vector<2x1xf32>
      %222 = vector.broadcast %220 : f32 to vector<2x1xf32>
      %223 = arith.select %66, %221, %222 : vector<2x1xi1>, vector<2x1xf32>
      %224 = vector.broadcast %223 : vector<2x1xf32> to vector<2x256xf32>
      %225 = arith.mulf %218, %224 : vector<2x256xf32>
      %226 = arith.addf %216, %225 : vector<2x256xf32>
      %c18_i32 = arith.constant 18 : i32
      %227 = tpu.dynamic_rotate %28 by %c18_i32 dim 1 : vector<2x256xf32>, i32 -> vector<2x256xf32>
      %c15 = arith.constant 15 : index
      %228 = memref.load %arg2[%c15] : memref<98xf32, #tpu.memory_space<smem>>
      %c64 = arith.constant 64 : index
      %229 = memref.load %arg2[%c64] : memref<98xf32, #tpu.memory_space<smem>>
      %230 = vector.broadcast %228 : f32 to vector<2x1xf32>
      %231 = vector.broadcast %229 : f32 to vector<2x1xf32>
      %232 = arith.select %66, %230, %231 : vector<2x1xi1>, vector<2x1xf32>
      %233 = vector.broadcast %232 : vector<2x1xf32> to vector<2x256xf32>
      %234 = arith.mulf %227, %233 : vector<2x256xf32>
      %235 = arith.addf %217, %234 : vector<2x256xf32>
      %c17_i32 = arith.constant 17 : i32
      %236 = tpu.dynamic_rotate %35 by %c17_i32 dim 1 : vector<2x256xf32>, i32 -> vector<2x256xf32>
      %c16 = arith.constant 16 : index
      %237 = memref.load %arg2[%c16] : memref<98xf32, #tpu.memory_space<smem>>
      %c65 = arith.constant 65 : index
      %238 = memref.load %arg2[%c65] : memref<98xf32, #tpu.memory_space<smem>>
      %239 = vector.broadcast %237 : f32 to vector<2x1xf32>
      %240 = vector.broadcast %238 : f32 to vector<2x1xf32>
      %241 = arith.select %66, %239, %240 : vector<2x1xi1>, vector<2x1xf32>
      %242 = vector.broadcast %241 : vector<2x1xf32> to vector<2x256xf32>
      %243 = arith.mulf %236, %242 : vector<2x256xf32>
      %244 = arith.addf %226, %243 : vector<2x256xf32>
      %c16_i32 = arith.constant 16 : i32
      %245 = tpu.dynamic_rotate %42 by %c16_i32 dim 1 : vector<2x256xf32>, i32 -> vector<2x256xf32>
      %c17 = arith.constant 17 : index
      %246 = memref.load %arg2[%c17] : memref<98xf32, #tpu.memory_space<smem>>
      %c66 = arith.constant 66 : index
      %247 = memref.load %arg2[%c66] : memref<98xf32, #tpu.memory_space<smem>>
      %248 = vector.broadcast %246 : f32 to vector<2x1xf32>
      %249 = vector.broadcast %247 : f32 to vector<2x1xf32>
      %250 = arith.select %66, %248, %249 : vector<2x1xi1>, vector<2x1xf32>
      %251 = vector.broadcast %250 : vector<2x1xf32> to vector<2x256xf32>
      %252 = arith.mulf %245, %251 : vector<2x256xf32>
      %253 = arith.addf %235, %252 : vector<2x256xf32>
      %c15_i32 = arith.constant 15 : i32
      %254 = tpu.dynamic_rotate %49 by %c15_i32 dim 1 : vector<2x256xf32>, i32 -> vector<2x256xf32>
      %c18 = arith.constant 18 : index
      %255 = memref.load %arg2[%c18] : memref<98xf32, #tpu.memory_space<smem>>
      %c67 = arith.constant 67 : index
      %256 = memref.load %arg2[%c67] : memref<98xf32, #tpu.memory_space<smem>>
      %257 = vector.broadcast %255 : f32 to vector<2x1xf32>
      %258 = vector.broadcast %256 : f32 to vector<2x1xf32>
      %259 = arith.select %66, %257, %258 : vector<2x1xi1>, vector<2x1xf32>
      %260 = vector.broadcast %259 : vector<2x1xf32> to vector<2x256xf32>
      %261 = arith.mulf %254, %260 : vector<2x256xf32>
      %262 = arith.addf %244, %261 : vector<2x256xf32>
      %c14_i32 = arith.constant 14 : i32
      %263 = tpu.dynamic_rotate %56 by %c14_i32 dim 1 : vector<2x256xf32>, i32 -> vector<2x256xf32>
      %c19 = arith.constant 19 : index
      %264 = memref.load %arg2[%c19] : memref<98xf32, #tpu.memory_space<smem>>
      %c68 = arith.constant 68 : index
      %265 = memref.load %arg2[%c68] : memref<98xf32, #tpu.memory_space<smem>>
      %266 = vector.broadcast %264 : f32 to vector<2x1xf32>
      %267 = vector.broadcast %265 : f32 to vector<2x1xf32>
      %268 = arith.select %66, %266, %267 : vector<2x1xi1>, vector<2x1xf32>
      %269 = vector.broadcast %268 : vector<2x1xf32> to vector<2x256xf32>
      %270 = arith.mulf %263, %269 : vector<2x256xf32>
      %271 = arith.addf %253, %270 : vector<2x256xf32>
      %c13_i32 = arith.constant 13 : i32
      %272 = tpu.dynamic_rotate %63 by %c13_i32 dim 1 : vector<2x256xf32>, i32 -> vector<2x256xf32>
      %c20 = arith.constant 20 : index
      %273 = memref.load %arg2[%c20] : memref<98xf32, #tpu.memory_space<smem>>
      %c69 = arith.constant 69 : index
      %274 = memref.load %arg2[%c69] : memref<98xf32, #tpu.memory_space<smem>>
      %275 = vector.broadcast %273 : f32 to vector<2x1xf32>
      %276 = vector.broadcast %274 : f32 to vector<2x1xf32>
      %277 = arith.select %66, %275, %276 : vector<2x1xi1>, vector<2x1xf32>
      %278 = vector.broadcast %277 : vector<2x1xf32> to vector<2x256xf32>
      %279 = arith.mulf %272, %278 : vector<2x256xf32>
      %280 = arith.addf %262, %279 : vector<2x256xf32>
      %c9_56 = arith.constant 9 : index
      %c0_57 = arith.constant 0 : index
      %281 = vector.load %arg3[%c9_56, %c0_57] : memref<14x256xf32, #tpu.memory_space<vmem>>, vector<1x256xf32>
      %cst_58 = arith.constant 0.000000e+00 : f32
      %282 = vector.broadcast %cst_58 : f32 to vector<1x256xf32>
      %283 = arith.cmpf one, %281, %282 : vector<1x256xf32>
      %284 = arith.addf %280, %271 : vector<2x256xf32>
      %cst_59 = arith.constant 0.000000e+00 : f32
      %285 = vector.shape_cast %283 : vector<1x256xi1> to vector<1x256xi1>
      %286 = vector.broadcast %285 : vector<1x256xi1> to vector<2x256xi1>
      %287 = vector.broadcast %cst_59 : f32 to vector<2x256xf32>
      %288 = arith.select %286, %284, %287 : vector<2x256xi1>, vector<2x256xf32>
      %289 = arith.addf %215, %288 : vector<2x256xf32>
      %cst_60 = arith.constant 0.000000e+00 : f32
      %290 = vector.broadcast %cst_60 : f32 to vector<2x256xf32>
      %cst_61 = arith.constant 0.000000e+00 : f32
      %291 = vector.broadcast %cst_61 : f32 to vector<2x256xf32>
      %c3_i32 = arith.constant 3 : i32
      %292 = tpu.dynamic_rotate %21 by %c3_i32 dim 1 : vector<2x256xf32>, i32 -> vector<2x256xf32>
      %c21 = arith.constant 21 : index
      %293 = memref.load %arg2[%c21] : memref<98xf32, #tpu.memory_space<smem>>
      %c70 = arith.constant 70 : index
      %294 = memref.load %arg2[%c70] : memref<98xf32, #tpu.memory_space<smem>>
      %295 = vector.broadcast %293 : f32 to vector<2x1xf32>
      %296 = vector.broadcast %294 : f32 to vector<2x1xf32>
      %297 = arith.select %66, %295, %296 : vector<2x1xi1>, vector<2x1xf32>
      %298 = vector.broadcast %297 : vector<2x1xf32> to vector<2x256xf32>
      %299 = arith.mulf %292, %298 : vector<2x256xf32>
      %300 = arith.addf %290, %299 : vector<2x256xf32>
      %c2_i32 = arith.constant 2 : i32
      %301 = tpu.dynamic_rotate %28 by %c2_i32 dim 1 : vector<2x256xf32>, i32 -> vector<2x256xf32>
      %c22 = arith.constant 22 : index
      %302 = memref.load %arg2[%c22] : memref<98xf32, #tpu.memory_space<smem>>
      %c71 = arith.constant 71 : index
      %303 = memref.load %arg2[%c71] : memref<98xf32, #tpu.memory_space<smem>>
      %304 = vector.broadcast %302 : f32 to vector<2x1xf32>
      %305 = vector.broadcast %303 : f32 to vector<2x1xf32>
      %306 = arith.select %66, %304, %305 : vector<2x1xi1>, vector<2x1xf32>
      %307 = vector.broadcast %306 : vector<2x1xf32> to vector<2x256xf32>
      %308 = arith.mulf %301, %307 : vector<2x256xf32>
      %309 = arith.addf %291, %308 : vector<2x256xf32>
      %c1_i32_62 = arith.constant 1 : i32
      %310 = tpu.dynamic_rotate %35 by %c1_i32_62 dim 1 : vector<2x256xf32>, i32 -> vector<2x256xf32>
      %c23 = arith.constant 23 : index
      %311 = memref.load %arg2[%c23] : memref<98xf32, #tpu.memory_space<smem>>
      %c72 = arith.constant 72 : index
      %312 = memref.load %arg2[%c72] : memref<98xf32, #tpu.memory_space<smem>>
      %313 = vector.broadcast %311 : f32 to vector<2x1xf32>
      %314 = vector.broadcast %312 : f32 to vector<2x1xf32>
      %315 = arith.select %66, %313, %314 : vector<2x1xi1>, vector<2x1xf32>
      %316 = vector.broadcast %315 : vector<2x1xf32> to vector<2x256xf32>
      %317 = arith.mulf %310, %316 : vector<2x256xf32>
      %318 = arith.addf %300, %317 : vector<2x256xf32>
      %c24 = arith.constant 24 : index
      %319 = memref.load %arg2[%c24] : memref<98xf32, #tpu.memory_space<smem>>
      %c73 = arith.constant 73 : index
      %320 = memref.load %arg2[%c73] : memref<98xf32, #tpu.memory_space<smem>>
      %321 = vector.broadcast %319 : f32 to vector<2x1xf32>
      %322 = vector.broadcast %320 : f32 to vector<2x1xf32>
      %323 = arith.select %66, %321, %322 : vector<2x1xi1>, vector<2x1xf32>
      %324 = vector.broadcast %323 : vector<2x1xf32> to vector<2x256xf32>
      %325 = arith.mulf %42, %324 : vector<2x256xf32>
      %326 = arith.addf %309, %325 : vector<2x256xf32>
      %c255_i32 = arith.constant 255 : i32
      %327 = tpu.dynamic_rotate %49 by %c255_i32 dim 1 : vector<2x256xf32>, i32 -> vector<2x256xf32>
      %c25 = arith.constant 25 : index
      %328 = memref.load %arg2[%c25] : memref<98xf32, #tpu.memory_space<smem>>
      %c74 = arith.constant 74 : index
      %329 = memref.load %arg2[%c74] : memref<98xf32, #tpu.memory_space<smem>>
      %330 = vector.broadcast %328 : f32 to vector<2x1xf32>
      %331 = vector.broadcast %329 : f32 to vector<2x1xf32>
      %332 = arith.select %66, %330, %331 : vector<2x1xi1>, vector<2x1xf32>
      %333 = vector.broadcast %332 : vector<2x1xf32> to vector<2x256xf32>
      %334 = arith.mulf %327, %333 : vector<2x256xf32>
      %335 = arith.addf %318, %334 : vector<2x256xf32>
      %c254_i32 = arith.constant 254 : i32
      %336 = tpu.dynamic_rotate %56 by %c254_i32 dim 1 : vector<2x256xf32>, i32 -> vector<2x256xf32>
      %c26 = arith.constant 26 : index
      %337 = memref.load %arg2[%c26] : memref<98xf32, #tpu.memory_space<smem>>
      %c75 = arith.constant 75 : index
      %338 = memref.load %arg2[%c75] : memref<98xf32, #tpu.memory_space<smem>>
      %339 = vector.broadcast %337 : f32 to vector<2x1xf32>
      %340 = vector.broadcast %338 : f32 to vector<2x1xf32>
      %341 = arith.select %66, %339, %340 : vector<2x1xi1>, vector<2x1xf32>
      %342 = vector.broadcast %341 : vector<2x1xf32> to vector<2x256xf32>
      %343 = arith.mulf %336, %342 : vector<2x256xf32>
      %344 = arith.addf %326, %343 : vector<2x256xf32>
      %c253_i32 = arith.constant 253 : i32
      %345 = tpu.dynamic_rotate %63 by %c253_i32 dim 1 : vector<2x256xf32>, i32 -> vector<2x256xf32>
      %c27 = arith.constant 27 : index
      %346 = memref.load %arg2[%c27] : memref<98xf32, #tpu.memory_space<smem>>
      %c76 = arith.constant 76 : index
      %347 = memref.load %arg2[%c76] : memref<98xf32, #tpu.memory_space<smem>>
      %348 = vector.broadcast %346 : f32 to vector<2x1xf32>
      %349 = vector.broadcast %347 : f32 to vector<2x1xf32>
      %350 = arith.select %66, %348, %349 : vector<2x1xi1>, vector<2x1xf32>
      %351 = vector.broadcast %350 : vector<2x1xf32> to vector<2x256xf32>
      %352 = arith.mulf %345, %351 : vector<2x256xf32>
      %353 = arith.addf %335, %352 : vector<2x256xf32>
      %c10_63 = arith.constant 10 : index
      %c0_64 = arith.constant 0 : index
      %354 = vector.load %arg3[%c10_63, %c0_64] : memref<14x256xf32, #tpu.memory_space<vmem>>, vector<1x256xf32>
      %cst_65 = arith.constant 0.000000e+00 : f32
      %355 = vector.broadcast %cst_65 : f32 to vector<1x256xf32>
      %356 = arith.cmpf one, %354, %355 : vector<1x256xf32>
      %357 = arith.addf %353, %344 : vector<2x256xf32>
      %cst_66 = arith.constant 0.000000e+00 : f32
      %358 = vector.shape_cast %356 : vector<1x256xi1> to vector<1x256xi1>
      %359 = vector.broadcast %358 : vector<1x256xi1> to vector<2x256xi1>
      %360 = vector.broadcast %cst_66 : f32 to vector<2x256xf32>
      %361 = arith.select %359, %357, %360 : vector<2x256xi1>, vector<2x256xf32>
      %362 = arith.addf %289, %361 : vector<2x256xf32>
      %cst_67 = arith.constant 0.000000e+00 : f32
      %363 = vector.broadcast %cst_67 : f32 to vector<2x256xf32>
      %cst_68 = arith.constant 0.000000e+00 : f32
      %364 = vector.broadcast %cst_68 : f32 to vector<2x256xf32>
      %c243_i32 = arith.constant 243 : i32
      %365 = tpu.dynamic_rotate %21 by %c243_i32 dim 1 : vector<2x256xf32>, i32 -> vector<2x256xf32>
      %c28 = arith.constant 28 : index
      %366 = memref.load %arg2[%c28] : memref<98xf32, #tpu.memory_space<smem>>
      %c77 = arith.constant 77 : index
      %367 = memref.load %arg2[%c77] : memref<98xf32, #tpu.memory_space<smem>>
      %368 = vector.broadcast %366 : f32 to vector<2x1xf32>
      %369 = vector.broadcast %367 : f32 to vector<2x1xf32>
      %370 = arith.select %66, %368, %369 : vector<2x1xi1>, vector<2x1xf32>
      %371 = vector.broadcast %370 : vector<2x1xf32> to vector<2x256xf32>
      %372 = arith.mulf %365, %371 : vector<2x256xf32>
      %373 = arith.addf %363, %372 : vector<2x256xf32>
      %c242_i32 = arith.constant 242 : i32
      %374 = tpu.dynamic_rotate %28 by %c242_i32 dim 1 : vector<2x256xf32>, i32 -> vector<2x256xf32>
      %c29 = arith.constant 29 : index
      %375 = memref.load %arg2[%c29] : memref<98xf32, #tpu.memory_space<smem>>
      %c78 = arith.constant 78 : index
      %376 = memref.load %arg2[%c78] : memref<98xf32, #tpu.memory_space<smem>>
      %377 = vector.broadcast %375 : f32 to vector<2x1xf32>
      %378 = vector.broadcast %376 : f32 to vector<2x1xf32>
      %379 = arith.select %66, %377, %378 : vector<2x1xi1>, vector<2x1xf32>
      %380 = vector.broadcast %379 : vector<2x1xf32> to vector<2x256xf32>
      %381 = arith.mulf %374, %380 : vector<2x256xf32>
      %382 = arith.addf %364, %381 : vector<2x256xf32>
      %c241_i32 = arith.constant 241 : i32
      %383 = tpu.dynamic_rotate %35 by %c241_i32 dim 1 : vector<2x256xf32>, i32 -> vector<2x256xf32>
      %c30 = arith.constant 30 : index
      %384 = memref.load %arg2[%c30] : memref<98xf32, #tpu.memory_space<smem>>
      %c79 = arith.constant 79 : index
      %385 = memref.load %arg2[%c79] : memref<98xf32, #tpu.memory_space<smem>>
      %386 = vector.broadcast %384 : f32 to vector<2x1xf32>
      %387 = vector.broadcast %385 : f32 to vector<2x1xf32>
      %388 = arith.select %66, %386, %387 : vector<2x1xi1>, vector<2x1xf32>
      %389 = vector.broadcast %388 : vector<2x1xf32> to vector<2x256xf32>
      %390 = arith.mulf %383, %389 : vector<2x256xf32>
      %391 = arith.addf %373, %390 : vector<2x256xf32>
      %c240_i32 = arith.constant 240 : i32
      %392 = tpu.dynamic_rotate %42 by %c240_i32 dim 1 : vector<2x256xf32>, i32 -> vector<2x256xf32>
      %c31 = arith.constant 31 : index
      %393 = memref.load %arg2[%c31] : memref<98xf32, #tpu.memory_space<smem>>
      %c80 = arith.constant 80 : index
      %394 = memref.load %arg2[%c80] : memref<98xf32, #tpu.memory_space<smem>>
      %395 = vector.broadcast %393 : f32 to vector<2x1xf32>
      %396 = vector.broadcast %394 : f32 to vector<2x1xf32>
      %397 = arith.select %66, %395, %396 : vector<2x1xi1>, vector<2x1xf32>
      %398 = vector.broadcast %397 : vector<2x1xf32> to vector<2x256xf32>
      %399 = arith.mulf %392, %398 : vector<2x256xf32>
      %400 = arith.addf %382, %399 : vector<2x256xf32>
      %c239_i32 = arith.constant 239 : i32
      %401 = tpu.dynamic_rotate %49 by %c239_i32 dim 1 : vector<2x256xf32>, i32 -> vector<2x256xf32>
      %c32 = arith.constant 32 : index
      %402 = memref.load %arg2[%c32] : memref<98xf32, #tpu.memory_space<smem>>
      %c81 = arith.constant 81 : index
      %403 = memref.load %arg2[%c81] : memref<98xf32, #tpu.memory_space<smem>>
      %404 = vector.broadcast %402 : f32 to vector<2x1xf32>
      %405 = vector.broadcast %403 : f32 to vector<2x1xf32>
      %406 = arith.select %66, %404, %405 : vector<2x1xi1>, vector<2x1xf32>
      %407 = vector.broadcast %406 : vector<2x1xf32> to vector<2x256xf32>
      %408 = arith.mulf %401, %407 : vector<2x256xf32>
      %409 = arith.addf %391, %408 : vector<2x256xf32>
      %c238_i32 = arith.constant 238 : i32
      %410 = tpu.dynamic_rotate %56 by %c238_i32 dim 1 : vector<2x256xf32>, i32 -> vector<2x256xf32>
      %c33 = arith.constant 33 : index
      %411 = memref.load %arg2[%c33] : memref<98xf32, #tpu.memory_space<smem>>
      %c82 = arith.constant 82 : index
      %412 = memref.load %arg2[%c82] : memref<98xf32, #tpu.memory_space<smem>>
      %413 = vector.broadcast %411 : f32 to vector<2x1xf32>
      %414 = vector.broadcast %412 : f32 to vector<2x1xf32>
      %415 = arith.select %66, %413, %414 : vector<2x1xi1>, vector<2x1xf32>
      %416 = vector.broadcast %415 : vector<2x1xf32> to vector<2x256xf32>
      %417 = arith.mulf %410, %416 : vector<2x256xf32>
      %418 = arith.addf %400, %417 : vector<2x256xf32>
      %c237_i32 = arith.constant 237 : i32
      %419 = tpu.dynamic_rotate %63 by %c237_i32 dim 1 : vector<2x256xf32>, i32 -> vector<2x256xf32>
      %c34 = arith.constant 34 : index
      %420 = memref.load %arg2[%c34] : memref<98xf32, #tpu.memory_space<smem>>
      %c83 = arith.constant 83 : index
      %421 = memref.load %arg2[%c83] : memref<98xf32, #tpu.memory_space<smem>>
      %422 = vector.broadcast %420 : f32 to vector<2x1xf32>
      %423 = vector.broadcast %421 : f32 to vector<2x1xf32>
      %424 = arith.select %66, %422, %423 : vector<2x1xi1>, vector<2x1xf32>
      %425 = vector.broadcast %424 : vector<2x1xf32> to vector<2x256xf32>
      %426 = arith.mulf %419, %425 : vector<2x256xf32>
      %427 = arith.addf %409, %426 : vector<2x256xf32>
      %c11_69 = arith.constant 11 : index
      %c0_70 = arith.constant 0 : index
      %428 = vector.load %arg3[%c11_69, %c0_70] : memref<14x256xf32, #tpu.memory_space<vmem>>, vector<1x256xf32>
      %cst_71 = arith.constant 0.000000e+00 : f32
      %429 = vector.broadcast %cst_71 : f32 to vector<1x256xf32>
      %430 = arith.cmpf one, %428, %429 : vector<1x256xf32>
      %431 = arith.addf %427, %418 : vector<2x256xf32>
      %cst_72 = arith.constant 0.000000e+00 : f32
      %432 = vector.shape_cast %430 : vector<1x256xi1> to vector<1x256xi1>
      %433 = vector.broadcast %432 : vector<1x256xi1> to vector<2x256xi1>
      %434 = vector.broadcast %cst_72 : f32 to vector<2x256xf32>
      %435 = arith.select %433, %431, %434 : vector<2x256xi1>, vector<2x256xf32>
      %436 = arith.addf %362, %435 : vector<2x256xf32>
      %cst_73 = arith.constant 0.000000e+00 : f32
      %437 = vector.broadcast %cst_73 : f32 to vector<2x256xf32>
      %cst_74 = arith.constant 0.000000e+00 : f32
      %438 = vector.broadcast %cst_74 : f32 to vector<2x256xf32>
      %c227_i32 = arith.constant 227 : i32
      %439 = tpu.dynamic_rotate %21 by %c227_i32 dim 1 : vector<2x256xf32>, i32 -> vector<2x256xf32>
      %c35 = arith.constant 35 : index
      %440 = memref.load %arg2[%c35] : memref<98xf32, #tpu.memory_space<smem>>
      %c84 = arith.constant 84 : index
      %441 = memref.load %arg2[%c84] : memref<98xf32, #tpu.memory_space<smem>>
      %442 = vector.broadcast %440 : f32 to vector<2x1xf32>
      %443 = vector.broadcast %441 : f32 to vector<2x1xf32>
      %444 = arith.select %66, %442, %443 : vector<2x1xi1>, vector<2x1xf32>
      %445 = vector.broadcast %444 : vector<2x1xf32> to vector<2x256xf32>
      %446 = arith.mulf %439, %445 : vector<2x256xf32>
      %447 = arith.addf %437, %446 : vector<2x256xf32>
      %c226_i32 = arith.constant 226 : i32
      %448 = tpu.dynamic_rotate %28 by %c226_i32 dim 1 : vector<2x256xf32>, i32 -> vector<2x256xf32>
      %c36 = arith.constant 36 : index
      %449 = memref.load %arg2[%c36] : memref<98xf32, #tpu.memory_space<smem>>
      %c85 = arith.constant 85 : index
      %450 = memref.load %arg2[%c85] : memref<98xf32, #tpu.memory_space<smem>>
      %451 = vector.broadcast %449 : f32 to vector<2x1xf32>
      %452 = vector.broadcast %450 : f32 to vector<2x1xf32>
      %453 = arith.select %66, %451, %452 : vector<2x1xi1>, vector<2x1xf32>
      %454 = vector.broadcast %453 : vector<2x1xf32> to vector<2x256xf32>
      %455 = arith.mulf %448, %454 : vector<2x256xf32>
      %456 = arith.addf %438, %455 : vector<2x256xf32>
      %c225_i32 = arith.constant 225 : i32
      %457 = tpu.dynamic_rotate %35 by %c225_i32 dim 1 : vector<2x256xf32>, i32 -> vector<2x256xf32>
      %c37 = arith.constant 37 : index
      %458 = memref.load %arg2[%c37] : memref<98xf32, #tpu.memory_space<smem>>
      %c86 = arith.constant 86 : index
      %459 = memref.load %arg2[%c86] : memref<98xf32, #tpu.memory_space<smem>>
      %460 = vector.broadcast %458 : f32 to vector<2x1xf32>
      %461 = vector.broadcast %459 : f32 to vector<2x1xf32>
      %462 = arith.select %66, %460, %461 : vector<2x1xi1>, vector<2x1xf32>
      %463 = vector.broadcast %462 : vector<2x1xf32> to vector<2x256xf32>
      %464 = arith.mulf %457, %463 : vector<2x256xf32>
      %465 = arith.addf %447, %464 : vector<2x256xf32>
      %c224_i32 = arith.constant 224 : i32
      %466 = tpu.dynamic_rotate %42 by %c224_i32 dim 1 : vector<2x256xf32>, i32 -> vector<2x256xf32>
      %c38 = arith.constant 38 : index
      %467 = memref.load %arg2[%c38] : memref<98xf32, #tpu.memory_space<smem>>
      %c87 = arith.constant 87 : index
      %468 = memref.load %arg2[%c87] : memref<98xf32, #tpu.memory_space<smem>>
      %469 = vector.broadcast %467 : f32 to vector<2x1xf32>
      %470 = vector.broadcast %468 : f32 to vector<2x1xf32>
      %471 = arith.select %66, %469, %470 : vector<2x1xi1>, vector<2x1xf32>
      %472 = vector.broadcast %471 : vector<2x1xf32> to vector<2x256xf32>
      %473 = arith.mulf %466, %472 : vector<2x256xf32>
      %474 = arith.addf %456, %473 : vector<2x256xf32>
      %c223_i32 = arith.constant 223 : i32
      %475 = tpu.dynamic_rotate %49 by %c223_i32 dim 1 : vector<2x256xf32>, i32 -> vector<2x256xf32>
      %c39 = arith.constant 39 : index
      %476 = memref.load %arg2[%c39] : memref<98xf32, #tpu.memory_space<smem>>
      %c88 = arith.constant 88 : index
      %477 = memref.load %arg2[%c88] : memref<98xf32, #tpu.memory_space<smem>>
      %478 = vector.broadcast %476 : f32 to vector<2x1xf32>
      %479 = vector.broadcast %477 : f32 to vector<2x1xf32>
      %480 = arith.select %66, %478, %479 : vector<2x1xi1>, vector<2x1xf32>
      %481 = vector.broadcast %480 : vector<2x1xf32> to vector<2x256xf32>
      %482 = arith.mulf %475, %481 : vector<2x256xf32>
      %483 = arith.addf %465, %482 : vector<2x256xf32>
      %c222_i32 = arith.constant 222 : i32
      %484 = tpu.dynamic_rotate %56 by %c222_i32 dim 1 : vector<2x256xf32>, i32 -> vector<2x256xf32>
      %c40 = arith.constant 40 : index
      %485 = memref.load %arg2[%c40] : memref<98xf32, #tpu.memory_space<smem>>
      %c89 = arith.constant 89 : index
      %486 = memref.load %arg2[%c89] : memref<98xf32, #tpu.memory_space<smem>>
      %487 = vector.broadcast %485 : f32 to vector<2x1xf32>
      %488 = vector.broadcast %486 : f32 to vector<2x1xf32>
      %489 = arith.select %66, %487, %488 : vector<2x1xi1>, vector<2x1xf32>
      %490 = vector.broadcast %489 : vector<2x1xf32> to vector<2x256xf32>
      %491 = arith.mulf %484, %490 : vector<2x256xf32>
      %492 = arith.addf %474, %491 : vector<2x256xf32>
      %c221_i32 = arith.constant 221 : i32
      %493 = tpu.dynamic_rotate %63 by %c221_i32 dim 1 : vector<2x256xf32>, i32 -> vector<2x256xf32>
      %c41 = arith.constant 41 : index
      %494 = memref.load %arg2[%c41] : memref<98xf32, #tpu.memory_space<smem>>
      %c90 = arith.constant 90 : index
      %495 = memref.load %arg2[%c90] : memref<98xf32, #tpu.memory_space<smem>>
      %496 = vector.broadcast %494 : f32 to vector<2x1xf32>
      %497 = vector.broadcast %495 : f32 to vector<2x1xf32>
      %498 = arith.select %66, %496, %497 : vector<2x1xi1>, vector<2x1xf32>
      %499 = vector.broadcast %498 : vector<2x1xf32> to vector<2x256xf32>
      %500 = arith.mulf %493, %499 : vector<2x256xf32>
      %501 = arith.addf %483, %500 : vector<2x256xf32>
      %c12_75 = arith.constant 12 : index
      %c0_76 = arith.constant 0 : index
      %502 = vector.load %arg3[%c12_75, %c0_76] : memref<14x256xf32, #tpu.memory_space<vmem>>, vector<1x256xf32>
      %cst_77 = arith.constant 0.000000e+00 : f32
      %503 = vector.broadcast %cst_77 : f32 to vector<1x256xf32>
      %504 = arith.cmpf one, %502, %503 : vector<1x256xf32>
      %505 = arith.addf %501, %492 : vector<2x256xf32>
      %cst_78 = arith.constant 0.000000e+00 : f32
      %506 = vector.shape_cast %504 : vector<1x256xi1> to vector<1x256xi1>
      %507 = vector.broadcast %506 : vector<1x256xi1> to vector<2x256xi1>
      %508 = vector.broadcast %cst_78 : f32 to vector<2x256xf32>
      %509 = arith.select %507, %505, %508 : vector<2x256xi1>, vector<2x256xf32>
      %510 = arith.addf %436, %509 : vector<2x256xf32>
      %cst_79 = arith.constant 0.000000e+00 : f32
      %511 = vector.broadcast %cst_79 : f32 to vector<2x256xf32>
      %cst_80 = arith.constant 0.000000e+00 : f32
      %512 = vector.broadcast %cst_80 : f32 to vector<2x256xf32>
      %c211_i32 = arith.constant 211 : i32
      %513 = tpu.dynamic_rotate %21 by %c211_i32 dim 1 : vector<2x256xf32>, i32 -> vector<2x256xf32>
      %c42 = arith.constant 42 : index
      %514 = memref.load %arg2[%c42] : memref<98xf32, #tpu.memory_space<smem>>
      %c91 = arith.constant 91 : index
      %515 = memref.load %arg2[%c91] : memref<98xf32, #tpu.memory_space<smem>>
      %516 = vector.broadcast %514 : f32 to vector<2x1xf32>
      %517 = vector.broadcast %515 : f32 to vector<2x1xf32>
      %518 = arith.select %66, %516, %517 : vector<2x1xi1>, vector<2x1xf32>
      %519 = vector.broadcast %518 : vector<2x1xf32> to vector<2x256xf32>
      %520 = arith.mulf %513, %519 : vector<2x256xf32>
      %521 = arith.addf %511, %520 : vector<2x256xf32>
      %c210_i32 = arith.constant 210 : i32
      %522 = tpu.dynamic_rotate %28 by %c210_i32 dim 1 : vector<2x256xf32>, i32 -> vector<2x256xf32>
      %c43 = arith.constant 43 : index
      %523 = memref.load %arg2[%c43] : memref<98xf32, #tpu.memory_space<smem>>
      %c92 = arith.constant 92 : index
      %524 = memref.load %arg2[%c92] : memref<98xf32, #tpu.memory_space<smem>>
      %525 = vector.broadcast %523 : f32 to vector<2x1xf32>
      %526 = vector.broadcast %524 : f32 to vector<2x1xf32>
      %527 = arith.select %66, %525, %526 : vector<2x1xi1>, vector<2x1xf32>
      %528 = vector.broadcast %527 : vector<2x1xf32> to vector<2x256xf32>
      %529 = arith.mulf %522, %528 : vector<2x256xf32>
      %530 = arith.addf %512, %529 : vector<2x256xf32>
      %c209_i32 = arith.constant 209 : i32
      %531 = tpu.dynamic_rotate %35 by %c209_i32 dim 1 : vector<2x256xf32>, i32 -> vector<2x256xf32>
      %c44 = arith.constant 44 : index
      %532 = memref.load %arg2[%c44] : memref<98xf32, #tpu.memory_space<smem>>
      %c93 = arith.constant 93 : index
      %533 = memref.load %arg2[%c93] : memref<98xf32, #tpu.memory_space<smem>>
      %534 = vector.broadcast %532 : f32 to vector<2x1xf32>
      %535 = vector.broadcast %533 : f32 to vector<2x1xf32>
      %536 = arith.select %66, %534, %535 : vector<2x1xi1>, vector<2x1xf32>
      %537 = vector.broadcast %536 : vector<2x1xf32> to vector<2x256xf32>
      %538 = arith.mulf %531, %537 : vector<2x256xf32>
      %539 = arith.addf %521, %538 : vector<2x256xf32>
      %c208_i32 = arith.constant 208 : i32
      %540 = tpu.dynamic_rotate %42 by %c208_i32 dim 1 : vector<2x256xf32>, i32 -> vector<2x256xf32>
      %c45 = arith.constant 45 : index
      %541 = memref.load %arg2[%c45] : memref<98xf32, #tpu.memory_space<smem>>
      %c94 = arith.constant 94 : index
      %542 = memref.load %arg2[%c94] : memref<98xf32, #tpu.memory_space<smem>>
      %543 = vector.broadcast %541 : f32 to vector<2x1xf32>
      %544 = vector.broadcast %542 : f32 to vector<2x1xf32>
      %545 = arith.select %66, %543, %544 : vector<2x1xi1>, vector<2x1xf32>
      %546 = vector.broadcast %545 : vector<2x1xf32> to vector<2x256xf32>
      %547 = arith.mulf %540, %546 : vector<2x256xf32>
      %548 = arith.addf %530, %547 : vector<2x256xf32>
      %c207_i32 = arith.constant 207 : i32
      %549 = tpu.dynamic_rotate %49 by %c207_i32 dim 1 : vector<2x256xf32>, i32 -> vector<2x256xf32>
      %c46 = arith.constant 46 : index
      %550 = memref.load %arg2[%c46] : memref<98xf32, #tpu.memory_space<smem>>
      %c95 = arith.constant 95 : index
      %551 = memref.load %arg2[%c95] : memref<98xf32, #tpu.memory_space<smem>>
      %552 = vector.broadcast %550 : f32 to vector<2x1xf32>
      %553 = vector.broadcast %551 : f32 to vector<2x1xf32>
      %554 = arith.select %66, %552, %553 : vector<2x1xi1>, vector<2x1xf32>
      %555 = vector.broadcast %554 : vector<2x1xf32> to vector<2x256xf32>
      %556 = arith.mulf %549, %555 : vector<2x256xf32>
      %557 = arith.addf %539, %556 : vector<2x256xf32>
      %c206_i32 = arith.constant 206 : i32
      %558 = tpu.dynamic_rotate %56 by %c206_i32 dim 1 : vector<2x256xf32>, i32 -> vector<2x256xf32>
      %c47 = arith.constant 47 : index
      %559 = memref.load %arg2[%c47] : memref<98xf32, #tpu.memory_space<smem>>
      %c96 = arith.constant 96 : index
      %560 = memref.load %arg2[%c96] : memref<98xf32, #tpu.memory_space<smem>>
      %561 = vector.broadcast %559 : f32 to vector<2x1xf32>
      %562 = vector.broadcast %560 : f32 to vector<2x1xf32>
      %563 = arith.select %66, %561, %562 : vector<2x1xi1>, vector<2x1xf32>
      %564 = vector.broadcast %563 : vector<2x1xf32> to vector<2x256xf32>
      %565 = arith.mulf %558, %564 : vector<2x256xf32>
      %566 = arith.addf %548, %565 : vector<2x256xf32>
      %c205_i32 = arith.constant 205 : i32
      %567 = tpu.dynamic_rotate %63 by %c205_i32 dim 1 : vector<2x256xf32>, i32 -> vector<2x256xf32>
      %c48 = arith.constant 48 : index
      %568 = memref.load %arg2[%c48] : memref<98xf32, #tpu.memory_space<smem>>
      %c97 = arith.constant 97 : index
      %569 = memref.load %arg2[%c97] : memref<98xf32, #tpu.memory_space<smem>>
      %570 = vector.broadcast %568 : f32 to vector<2x1xf32>
      %571 = vector.broadcast %569 : f32 to vector<2x1xf32>
      %572 = arith.select %66, %570, %571 : vector<2x1xi1>, vector<2x1xf32>
      %573 = vector.broadcast %572 : vector<2x1xf32> to vector<2x256xf32>
      %574 = arith.mulf %567, %573 : vector<2x256xf32>
      %575 = arith.addf %557, %574 : vector<2x256xf32>
      %c13_81 = arith.constant 13 : index
      %c0_82 = arith.constant 0 : index
      %576 = vector.load %arg3[%c13_81, %c0_82] : memref<14x256xf32, #tpu.memory_space<vmem>>, vector<1x256xf32>
      %cst_83 = arith.constant 0.000000e+00 : f32
      %577 = vector.broadcast %cst_83 : f32 to vector<1x256xf32>
      %578 = arith.cmpf one, %576, %577 : vector<1x256xf32>
      %579 = arith.addf %575, %566 : vector<2x256xf32>
      %cst_84 = arith.constant 0.000000e+00 : f32
      %580 = vector.shape_cast %578 : vector<1x256xi1> to vector<1x256xi1>
      %581 = vector.broadcast %580 : vector<1x256xi1> to vector<2x256xi1>
      %582 = vector.broadcast %cst_84 : f32 to vector<2x256xf32>
      %583 = arith.select %581, %579, %582 : vector<2x256xi1>, vector<2x256xf32>
      %584 = arith.addf %510, %583 : vector<2x256xf32>
      %585 = vector.extract_strided_slice %584 {offsets = [0, 0], sizes = [1, 256], strides = [1, 1]} : vector<2x256xf32> to vector<1x256xf32>
      %586 = vector.extract_strided_slice %584 {offsets = [1, 0], sizes = [1, 256], strides = [1, 1]} : vector<2x256xf32> to vector<1x256xf32>
      %587 = arith.addf %585, %586 : vector<1x256xf32>
      %588 = arith.negf %587 : vector<1x256xf32>
      %589 = math.exp %588 : vector<1x256xf32>
      %cst_85 = arith.constant 1.000000e+00 : f32
      %590 = vector.broadcast %cst_85 : f32 to vector<1x256xf32>
      %591 = arith.addf %590, %589 : vector<1x256xf32>
      %592 = arith.divf %590, %591 : vector<1x256xf32>
      %c0_86 = arith.constant 0 : index
      %c0_87 = arith.constant 0 : index
      %c0_88 = arith.constant 0 : index
      %593 = vector.load %arg5[%c0_86, %c0_87, %c0_88] : memref<1x1x256xf32, #tpu.memory_space<vmem>>, vector<1x1x256xf32>
      %594 = vector.shape_cast %593 : vector<1x1x256xf32> to vector<1x256xf32>
      %595 = vector.shape_cast %592 : vector<1x256xf32> to vector<1x1x256xf32>
      tpu.vector_store %arg5[%c0_86, %c0_87, %c0_88], %595 {strides = array<i32>} : memref<1x1x256xf32, #tpu.memory_space<vmem>>, vector<1x1x256xf32>,
    } else {
    }
    return
  }
  func.func @transform_0(%arg0: i32, %arg1: i32) -> i32 {
    %c0_i32 = arith.constant 0 : i32
    %c0_i32_0 = arith.constant 0 : i32
    return %c0_i32 : i32
  }
  func.func @transform_1(%arg0: i32, %arg1: i32) -> (i32, i32) {
    %c0_i32 = arith.constant 0 : i32
    %c0_i32_0 = arith.constant 0 : i32
    %c0_i32_1 = arith.constant 0 : i32
    return %c0_i32, %c0_i32_0 : i32, i32
  }
  func.func @transform_2(%arg0: i32, %arg1: i32) -> (i32, i32, i32) {
    %c0_i32 = arith.constant 0 : i32
    %c0_i32_0 = arith.constant 0 : i32
    return %arg0, %arg1, %c0_i32 : i32, i32, i32
  }
  func.func @transform_3(%arg0: i32, %arg1: i32) -> (i32, i32, i32) {
    %c0_i32 = arith.constant 0 : i32
    %c0_i32_0 = arith.constant 0 : i32
    %c0_i32_1 = arith.constant 0 : i32
    return %arg0, %c0_i32, %c0_i32_0 : i32, i32, i32
  }
}

</mosaic_0001>

<llo_original>
// kernel: tpu_custom_call.1
$region0: #{tpu_custom_call.1}
  #allocation0 [shape = 'u32[]', space=smem, size = 0x4, offset = 0x4, fixed_abs, tag = 'smem constant byte address 0x4 - core index']
  #allocation1 [shape = 'u32[144,128]{1,0:T(1,128)}', space=vmem, size = 0x12000, scoped, tag = 'internal scratch']
  #allocation2 [shape = 'f32[1,256]{1,0:T(1,128)}', space=vmem, size = 0x400, scoped, tag = 'scratch operand']
  #allocation3 [shape = 'f32[1,256]{1,0:T(1,128)}', space=vmem, size = 0x400, scoped, tag = 'scratch operand']
  %s0 = inlined_call_operand.hbm [shape: f32[98], index: 0, kind: input, shape index: {}]
  %s1 = inlined_call_operand.hbm [shape: f32[14,256], index: 1, kind: input, shape index: {}]
  %s2 = inlined_call_operand.hbm [shape: f32[2,16,256], index: 2, kind: input, shape index: {}]
  %s3 = inlined_call_operand.hbm [shape: f32[2,1,256], index: 3, kind: output, shape index: {}]
  %s4 = sld [smem:[#allocation0]]
  $region69: #{tpu_custom_call.1} parent=0
    _
  %s6 = ssub.s32 1, %s4
  %s7 = scalar_select 0, %s6, %s4
  $region1: #{tpu_custom_call.1} parent=0
    #allocation4 [shape = 'u8[512]{0}', space=smem, size = 0x200, scoped, tag = 'input window, operand 0, single buffered']
    #allocation5 [shape = 's32[2]{0}', space=sflag, size = 0x8, scoped, tag = 'scoped memory for tpu_custom_call.1']
    #allocation6 [shape = 's32[2]{0}', space=sflag, size = 0x8, scoped, tag = 'scoped memory for tpu_custom_call.1']
    #allocation7 [shape = 's32[2]{0}', space=sflag, size = 0x8, scoped, tag = 'scoped memory for tpu_custom_call.1']
    #allocation8 [shape = 'u8[16384]{0}', space=vmem, size = 0x4000, scoped, tag = 'input window, operand 1, single buffered']
    #allocation9 [shape = 'u8[32768]{0}', space=vmem, size = 0x8000, scoped, tag = 'input window, operand 2']
    #allocation10 [shape = 's32[2]{0}', space=sflag, size = 0x8, scoped, tag = 'scoped memory for tpu_custom_call.1']
    #allocation11 [shape = 'u8[2048]{0}', space=vmem, size = 0x800, scoped, tag = 'output window, operand 0']
    %8 = vsyncpa [#allocation7], 0
    %9 = vsyncpa [#allocation5], 0
    %10 = vsyncpa [#allocation10], 0
    %s11 = scalar_lea.sflag [#allocation10], 1
    %12 = vsyncpa %s11, 0
    %13 = vsyncpa [#allocation6], 0
    %s14 = scalar_lea.sflag [#allocation6], 1
    %15 = vsyncpa %s14, 0
    loop: start=0, step=1, limit=4
    $region2: #{tpu_custom_call.1} parent=1 // loop_pre_header
      _
    $region3: #{tpu_custom_call.1} parent=1 // loop_header
      %s17 = sphi 0, %s21
      %p18 = scmp.ge.s32.totalorder %s17, 4
      %s24 = sphi 0, %s36
      %s25 = sphi 0, %s32
      %s26 = sphi 0, %s24
      %s27 = sphi 0, %s25
      %s28 = sphi 0, %s26
      %s29 = sphi 0, %s27
      %s37 = sphi 0, %s37
      %s39 = sphi 0, %s37
      %s40 = sphi 0, %s39
      %s54 = sphi 0, %s40
      %s58 = sphi 0, %s58
      %s60 = sphi 0, %s58
      %s61 = sphi 0, %s60
      %s75 = sphi 0, %s61
      %s83 = sphi 0, %s85
      %s86 = sphi 0, %s83
      %s87 = sphi 0, %s86
      %s103 = sphi 0, %s87
      %s109 = sphi 0, %s111
      %s112 = sphi 0, %s109
      %s113 = sphi 0, %s112
      %s129 = sphi 0, %s113
    $region4: #{tpu_custom_call.1} parent=1 // loop_header_branch
      %20 = sbr.rel (%p18) target = $region8
    $region5: #{tpu_custom_call.1} parent=1 // loop_body
      %s22 = ssub.s32 %s17, 1
      %s23 = ssub.s32 %s17, 2
      %s30 = sadd.s32 1, %s25
      %p31 = scmp.ge.s32.totalorder %s30, 1
      %s32 = scalar_select %p31, 0, %s30
      %s33 = sadd.s32 1, %s24
      %s34 = scalar_select %p31, %s33, %s24
      %p35 = scmp.ge.s32.totalorder %s34, 2
      %s36 = scalar_select %p35, 0, %s34
      %s38 = sadd.s32 %s37, 1
      %p41 = scmp.eq.s32.totalorder %s17, 1
      %p42 = scmp.ne.s32.totalorder %s37, %s39
      %p43 = scmp.eq.s32.totalorder %s17, 0
      %p44 = por %p42, %p43
      %p45 = scmp.ne.s32.totalorder %s37, %s39
      %p46 = scmp.eq.s32.totalorder %s22, 1
      %p47 = por %p45, %p46
      %p48 = scmp.ne.s32.totalorder %s39, %s40
      %p49 = scmp.eq.s32.totalorder %s22, 0
      %p50 = por %p48, %p49
      %p51 = scmp.ne.s32.totalorder %s39, %s40
      %p52 = scmp.eq.s32.totalorder %s23, 1
      %p53 = por %p51, %p52
      %p55 = scmp.ne.s32.totalorder %s40, %s54
      %p56 = scmp.eq.s32.totalorder %s23, 0
      %p57 = por %p55, %p56
      %s59 = sadd.s32 %s58, 1
      %p62 = scmp.eq.s32.totalorder %s17, 1
      %p63 = scmp.ne.s32.totalorder %s58, %s60
      %p64 = scmp.eq.s32.totalorder %s17, 0
      %p65 = por %p63, %p64
      %p66 = scmp.ne.s32.totalorder %s58, %s60
      %p67 = scmp.eq.s32.totalorder %s22, 1
      %p68 = por %p66, %p67
      %p69 = scmp.ne.s32.totalorder %s60, %s61
      %p70 = scmp.eq.s32.totalorder %s22, 0
      %p71 = por %p69, %p70
      %p72 = scmp.ne.s32.totalorder %s60, %s61
      %p73 = scmp.eq.s32.totalorder %s23, 1
      %p74 = por %p72, %p73
      %p76 = scmp.ne.s32.totalorder %s61, %s75
      %p77 = scmp.eq.s32.totalorder %s23, 0
      %p78 = por %p76, %p77
      %s79 = ssub.s32 %s24, %s36
      %s80 = ssub.s32 %s25, %s32
      %s81 = sor.u32 %s79, %s80
      %p82 = scmp.eq.s32.totalorder %s81, 0
      %s84 = sadd.s32 %s83, 1
      %s85 = scalar_select %p82, %s83, %s84
      %p88 = pneg %p82
      %p89 = scmp.eq.s32.totalorder %s17, 1
      %p90 = por %p88, %p89
      %p91 = scmp.ne.s32.totalorder %s83, %s86
      %p92 = scmp.eq.s32.totalorder %s17, 0
      %p93 = por %p91, %p92
      %p94 = scmp.ne.s32.totalorder %s83, %s86
      %p95 = scmp.eq.s32.totalorder %s22, 1
      %p96 = por %p94, %p95
      %p97 = scmp.ne.s32.totalorder %s86, %s87
      %p98 = scmp.eq.s32.totalorder %s22, 0
      %p99 = por %p97, %p98
      %p100 = scmp.ne.s32.totalorder %s86, %s87
      %p101 = scmp.eq.s32.totalorder %s23, 1
      %p102 = por %p100, %p101
      %p104 = scmp.ne.s32.totalorder %s87, %s103
      %p105 = scmp.eq.s32.totalorder %s23, 0
      %p106 = por %p104, %p105
      %s107 = ssub.s32 %s24, %s36
      %p108 = scmp.eq.s32.totalorder %s107, 0
      %s110 = sadd.s32 %s109, 1
      %s111 = scalar_select %p108, %s109, %s110
      %p114 = pneg %p108
      %p115 = scmp.eq.s32.totalorder %s17, 1
      %p116 = por %p114, %p115
      %p117 = scmp.ne.s32.totalorder %s109, %s112
      %p118 = scmp.eq.s32.totalorder %s17, 0
      %p119 = por %p117, %p118
      %p120 = scmp.ne.s32.totalorder %s109, %s112
      %p121 = scmp.eq.s32.totalorder %s22, 1
      %p122 = por %p120, %p121
      %p123 = scmp.ne.s32.totalorder %s112, %s113
      %p124 = scmp.eq.s32.totalorder %s22, 0
      %p125 = por %p123, %p124
      %p126 = scmp.ne.s32.totalorder %s112, %s113
      %p127 = scmp.eq.s32.totalorder %s23, 1
      %p128 = por %p126, %p127
      %p130 = scmp.ne.s32.totalorder %s113, %s129
      %p131 = scmp.eq.s32.totalorder %s23, 0
      %p132 = por %p130, %p131
      %p133 = scmp.le.s32.totalorder 1, %s17
      %p134 = scmp.lt.s32.totalorder %s17, 3
      %p135 = pnand %p133, %p134
      %p136 = pneg %p135
      // Predicated region
      $region9: #{tpu_custom_call.1} parent=5 // pred_check
        _
      $region10: #{tpu_custom_call.1} parent=5 // pred_check_branch
        %138 = sbr.rel (%p135) target = $region12
      $region11: #{tpu_custom_call.1} parent=5 // pred_region
        %s139 = ssub.s32 %s17, 1
        // Predicated region
        $region13: #{tpu_custom_call.1} parent=11 // pred_check
          %p140 = pneg %p50
        $region14: #{tpu_custom_call.1} parent=11 // pred_check_branch
          %142 = sbr.rel (%p140) target = $region16
        $region15: #{tpu_custom_call.1} parent=11 // pred_region
          %s144 = ssub.s32 16, 16
          %145 = vsyncadd [#allocation7], %s144
          %148 = dma.hbm_to_smem %s0, 16, [#allocation4], [#allocation7]
        $region16: #{tpu_custom_call.1} parent=11 // pred_fallthru
          _
        // Predicated region
        $region17: #{tpu_custom_call.1} parent=11 // pred_check
          %p149 = pneg %p71
        $region18: #{tpu_custom_call.1} parent=11 // pred_check_branch
          %151 = sbr.rel (%p149) target = $region20
        $region19: #{tpu_custom_call.1} parent=11 // pred_region
          %s153 = ssub.s32 512, 512
          %154 = vsyncadd [#allocation5], %s153
          %s155 = sshll.u32 [#allocation8], 4
          %s156 = int_to_ptr.vmem [resolvable:$true] %s155
          %161 = dma.hbm_to_vmem [thread:$0]  %s1, 512, %s156, [#allocation5], 256, 256, 16
        $region20: #{tpu_custom_call.1} parent=11 // pred_fallthru
          _
      $region12: #{tpu_custom_call.1} parent=5 // pred_fallthru
        _
      %p162 = scmp.lt.s32.totalorder %s17, 2
      // Predicated region
      $region21: #{tpu_custom_call.1} parent=5 // pred_check
        %p163 = pneg %p162
      $region22: #{tpu_custom_call.1} parent=5 // pred_check_branch
        %165 = sbr.rel (%p163) target = $region24
      $region23: #{tpu_custom_call.1} parent=5 // pred_region
        // Predicated region
        $region25: #{tpu_custom_call.1} parent=23 // pred_check
          %p166 = pneg %p93
        $region26: #{tpu_custom_call.1} parent=23 // pred_check_branch
          %168 = sbr.rel (%p166) target = $region28
        $region27: #{tpu_custom_call.1} parent=23 // pred_region
          %s169 = sand.u32 %s83, 1
          %s170 = scalar_lea.sflag [#allocation10], %s169
          %s171 = sand.u32 %s83, 1
          %s172 = smul.addr %s171, 32
          %s173 = scalar_lea.vmem [#allocation9], %s172
          %s174 = smul.u32 2, %s25
          %s176 = ssub.s32 512, 512
          %177 = vsyncadd %s170, %s176
          %s178 = smul.addr %s174, 2
          %s179 = smul.addr %s24, 4
          %s180 = sadd.s32 %s178, %s179
          %s181 = smul.addr %s180, 128
          %s182 = scalar_lea.hbm %s2, %s181
          %s183 = sshll.u32 %s173, 4
          %s184 = int_to_ptr.vmem [resolvable:$true] %s183
          %189 = dma.hbm_to_vmem [thread:$0]  %s182, 512, %s184, %s170, 256, 256, 16
        $region28: #{tpu_custom_call.1} parent=23 // pred_fallthru
          _
      $region24: #{tpu_custom_call.1} parent=5 // pred_fallthru
        _
      %p190 = scmp.le.s32.totalorder 1, %s17
      %p191 = scmp.lt.s32.totalorder %s17, 3
      %p192 = pnand %p190, %p191
      %p193 = pneg %p192
      // Predicated region
      $region29: #{tpu_custom_call.1} parent=5 // pred_check
        _
      $region30: #{tpu_custom_call.1} parent=5 // pred_check_branch
        %195 = sbr.rel (%p192) target = $region32
      $region31: #{tpu_custom_call.1} parent=5 // pred_region
        %s196 = ssub.s32 %s17, 1
        // Predicated region
        $region33: #{tpu_custom_call.1} parent=31 // pred_check
          %p197 = pneg %p50
        $region34: #{tpu_custom_call.1} parent=31 // pred_check_branch
          %199 = sbr.rel (%p197) target = $region36
        $region35: #{tpu_custom_call.1} parent=31 // pred_region
          %200 = dma.done [#allocation7], 16
        $region36: #{tpu_custom_call.1} parent=31 // pred_fallthru
          _
        // Predicated region
        $region37: #{tpu_custom_call.1} parent=31 // pred_check
          %p201 = pneg %p71
        $region38: #{tpu_custom_call.1} parent=31 // pred_check_branch
          %203 = sbr.rel (%p201) target = $region40
        $region39: #{tpu_custom_call.1} parent=31 // pred_region
          %204 = dma.done [#allocation5], 512
        $region40: #{tpu_custom_call.1} parent=31 // pred_fallthru
          _
        %s205 = sand.u32 %s86, 1
        %s206 = scalar_lea.sflag [#allocation10], %s205
        %s207 = sand.u32 %s86, 1
        %s208 = smul.addr %s207, 32
        %s209 = scalar_lea.vmem [#allocation9], %s208
        // Predicated region
        $region41: #{tpu_custom_call.1} parent=31 // pred_check
          %p210 = pneg %p99
        $region42: #{tpu_custom_call.1} parent=31 // pred_check_branch
          %212 = sbr.rel (%p210) target = $region44
        $region43: #{tpu_custom_call.1} parent=31 // pred_region
          %213 = dma.done %s206, 512
        $region44: #{tpu_custom_call.1} parent=31 // pred_fallthru
          _
        %214 = sfence
        %p215 = pneg %p50
        %p216 = pneg %p47
        %p217 = pneg %p71
        %p218 = pneg %p68
        %s219 = sand.u32 %s86, 1
        %s220 = scalar_lea.sflag [#allocation10], %s219
        %s221 = sand.u32 %s86, 1
        %s222 = smul.addr %s221, 32
        %s223 = scalar_lea.vmem [#allocation9], %s222
        %p224 = pneg %p99
        %p225 = pneg %p96
        %p226 = pneg %p125
        %p227 = pneg %p122
        %s228 = sand.u32 %s112, 1
        %s229 = scalar_lea.sflag [#allocation6], %s228
        %s230 = sand.u32 %s112, 1
        %s231 = smul.addr %s230, 2
        %s232 = scalar_lea.vmem [#allocation11], %s231
        %s233 = smul.u32 2, %s27
        %v234 = vld [vmem:[%s209] sm:$0xff]
        %v235 = vld [vmem:[%s209 + $0x8] sm:$0xff]
        %v236 = vld [vmem:[%s209 + $0x10] sm:$0xff]
        %v237 = vld [vmem:[%s209 + $0x18] sm:$0xff]
        %v238 = vadd.f32 %v234, %v236
        %v239 = vrot.slane %v238, 4
        %v240 = vadd.f32 %v238, %v239
        %v241 = vrot.slane %v240, 2
        %v242 = vadd.f32 %v240, %v241
        %v243 = vrot.slane %v242, 1
        %v244 = vadd.f32 %v242, %v243
        %v245 = vadd.f32 %v235, %v237
        %v246 = vrot.slane %v245, 4
        %v247 = vadd.f32 %v245, %v246
        %v248 = vrot.slane %v247, 2
        %v249 = vadd.f32 %v247, %v248
        %v250 = vrot.slane %v249, 1
        %v251 = vadd.f32 %v249, %v250
        %v252 = vmax.f32 %v234, %v236
        %v253 = vrot.slane %v252, 4
        %v254 = vmax.f32 %v252, %v253
        %v255 = vrot.slane %v254, 2
        %v256 = vmax.f32 %v254, %v255
        %v257 = vrot.slane %v256, 1
        %v258 = vmax.f32 %v256, %v257
        %v259 = vmax.f32 %v235, %v237
        %v260 = vrot.slane %v259, 4
        %v261 = vmax.f32 %v259, %v260
        %v262 = vrot.slane %v261, 2
        %v263 = vmax.f32 %v261, %v262
        %v264 = vrot.slane %v263, 1
        %v265 = vmax.f32 %v263, %v264
        %p266 = scmp.eq.s32.totalorder %s27, 0
        // Predicated region
        $region45: #{tpu_custom_call.1} parent=31 // pred_check
          %p267 = pneg %p266
        $region46: #{tpu_custom_call.1} parent=31 // pred_check_branch
          %269 = sbr.rel (%p267) target = $region48
        $region47: #{tpu_custom_call.1} parent=31 // pred_region
          %v272 = vcombine.low %v244, %v251
          %v274 = vunpack.c.l.s4 1966171168
          %v275 = vunpack.c.0.s8 %v274
          %v276 = vlaneseq
          %v277 = vshrl.u32 %v276, 7
          %v278 = vsub.s32 %v275, %v277
          %v279 = vrot.slane %v272, %v278
          %v281 = vunpack.c.l.s4 1966171168
          %v282 = vunpack.c.0.s8 %v281
          %v283 = vlaneseq
          %v284 = vshrl.u32 %v283, 7
          %v285 = vsub.s32 %v282, %v284
          %v286 = vrot.slane %v279, %v285
          %v288 = vlaneseq
          %vm289 = vcmp.ge.s32.totalorder %v288, 0
          %vm290 = vcmp.lt.s32.totalorder %v288, 256
          %vm291 = vmand %vm289, %vm290
          %292 = vst.msk [vmem:[#allocation2] sm:$0x3] %vm291, %v286
          %v295 = vcombine.low %v258, %v265
          %v297 = vunpack.c.l.s4 1966171168
          %v298 = vunpack.c.0.s8 %v297
          %v299 = vlaneseq
          %v300 = vshrl.u32 %v299, 7
          %v301 = vsub.s32 %v298, %v300
          %v302 = vrot.slane %v295, %v301
          %v304 = vunpack.c.l.s4 1966171168
          %v305 = vunpack.c.0.s8 %v304
          %v306 = vlaneseq
          %v307 = vshrl.u32 %v306, 7
          %v308 = vsub.s32 %v305, %v307
          %v309 = vrot.slane %v302, %v308
          %311 = vst.msk [vmem:[#allocation3] sm:$0x3] %vm291, %v309
        $region48: #{tpu_custom_call.1} parent=31 // pred_fallthru
          _
        %p312 = scmp.ne.s32.totalorder %s27, 0
        // Predicated region
        $region49: #{tpu_custom_call.1} parent=31 // pred_check
          %p313 = pneg %p312
        $region50: #{tpu_custom_call.1} parent=31 // pred_check_branch
          %315 = sbr.rel (%p313) target = $region52
        $region51: #{tpu_custom_call.1} parent=31 // pred_region
          %v316 = vld [vmem:[#allocation2] sm:$0x3]
          %v319 = vcombine.low %v244, %v251
          %v321 = vunpack.c.l.s4 1966171168
          %v322 = vunpack.c.0.s8 %v321
          %v323 = vlaneseq
          %v324 = vshrl.u32 %v323, 7
          %v325 = vsub.s32 %v322, %v324
          %v326 = vrot.slane %v319, %v325
          %v328 = vunpack.c.l.s4 1966171168
          %v329 = vunpack.c.0.s8 %v328
          %v330 = vlaneseq
          %v331 = vshrl.u32 %v330, 7
          %v332 = vsub.s32 %v329, %v331
          %v333 = vrot.slane %v326, %v332
          %v335 = vadd.f32 %v316, %v333
          %v336 = vlaneseq
          %vm337 = vcmp.ge.s32.totalorder %v336, 0
          %vm338 = vcmp.lt.s32.totalorder %v336, 256
          %vm339 = vmand %vm337, %vm338
          %340 = vst.msk [vmem:[#allocation2] sm:$0x3] %vm339, %v335
          %v341 = vld [vmem:[#allocation3] sm:$0x3]
          %v344 = vcombine.low %v258, %v265
          %v346 = vunpack.c.l.s4 1966171168
          %v347 = vunpack.c.0.s8 %v346
          %v348 = vlaneseq
          %v349 = vshrl.u32 %v348, 7
          %v350 = vsub.s32 %v347, %v349
          %v351 = vrot.slane %v344, %v350
          %v353 = vunpack.c.l.s4 1966171168
          %v354 = vunpack.c.0.s8 %v353
          %v355 = vlaneseq
          %v356 = vshrl.u32 %v355, 7
          %v357 = vsub.s32 %v354, %v356
          %v358 = vrot.slane %v351, %v357
          %v360 = vmax.f32 %v341, %v358
          %361 = vst.msk [vmem:[#allocation3] sm:$0x3] %vm339, %v360
        $region52: #{tpu_custom_call.1} parent=31 // pred_fallthru
          _
        // Predicated region
        $region53: #{tpu_custom_call.1} parent=31 // pred_check
          %p362 = pneg %p266
        $region54: #{tpu_custom_call.1} parent=31 // pred_check_branch
          %364 = sbr.rel (%p362) target = $region56
        $region55: #{tpu_custom_call.1} parent=31 // pred_region
          %v365 = vld [vmem:[#allocation2] sm:$0x3]
          %v366 = vld [vmem:[#allocation3] sm:$0x3]
          %v368 = vlaneseq
          %v369 = vshrl.u32 %v368, 7
          %v370 = vsub.s32 0, %v369
          %v371 = vrot.slane %v365, %v370
          %v372 = vlaneseq
          %v373 = vshrl.u32 %v372, 7
          %v374 = vsub.s32 1, %v373
          %v375 = vrot.slane %v365, %v374
          %v379 = vlaneseq
          %v380 = vshrl.u32 %v379, 7
          %v381 = vsub.s32 0, %v380
          %v382 = vrot.slane %v366, %v381
          %v383 = vlaneseq
          %v384 = vshrl.u32 %v383, 7
          %v385 = vsub.s32 1, %v384
          %v386 = vrot.slane %v366, %v385
          %vm389 = vcmask 1040384
          %v390 = vsel %vm389, %v371, %v382
          %v391 = vsel %vm389, %v375, %v386
          %v392 = vld [vmem:[#allocation8] ss:$8 sm:$0x3]
          %vm393 = vcmp.ne.f32.partialorder %v392, 0.0
          %v394 = vsel %vm393, 1, 0
          %v395 = vlaneseq
          %v396 = vshrl.u32 %v395, 7
          %v397 = vsub.s32 0, %v396
          %v398 = vrot.slane %v394, %v397
          %v399 = vlaneseq
          %v400 = vshrl.u32 %v399, 7
          %v401 = vsub.s32 1, %v400
          %v402 = vrot.slane %v394, %v401
          %vm403 = vcmp.eq.s32.totalorder %v398, 1
          %vm404 = vcmp.eq.s32.totalorder %v402, 1
          %v405 = vsel %vm403, %v390, 0.0
          %v406 = vsel %vm404, %v391, 0.0
          %s407 = scalar_lea.vmem [#allocation8], 1
          %v408 = vld [vmem:[%s407] ss:$8 sm:$0x3]
          %vm409 = vcmp.ne.f32.partialorder %v408, 0.0
          %v410 = vsel %vm409, 1, 0
          %v411 = vlaneseq
          %v412 = vshrl.u32 %v411, 7
          %v413 = vsub.s32 0, %v412
          %v414 = vrot.slane %v410, %v413
          %v415 = vlaneseq
          %v416 = vshrl.u32 %v415, 7
          %v417 = vsub.s32 1, %v416
          %v418 = vrot.slane %v410, %v417
          %vm419 = vcmp.eq.s32.totalorder %v414, 1
          %vm420 = vcmp.eq.s32.totalorder %v418, 1
          %v421 = vsel %vm419, %v390, 0.0
          %v422 = vsel %vm420, %v391, 0.0
          %s423 = scalar_lea.vmem [#allocation8], 2
          %v424 = vld [vmem:[%s423] ss:$8 sm:$0x3]
          %vm425 = vcmp.ne.f32.partialorder %v424, 0.0
          %v426 = vsel %vm425, 1, 0
          %v427 = vlaneseq
          %v428 = vshrl.u32 %v427, 7
          %v429 = vsub.s32 0, %v428
          %v430 = vrot.slane %v426, %v429
          %v431 = vlaneseq
          %v432 = vshrl.u32 %v431, 7
          %v433 = vsub.s32 1, %v432
          %v434 = vrot.slane %v426, %v433
          %vm435 = vcmp.eq.s32.totalorder %v430, 1
          %vm436 = vcmp.eq.s32.totalorder %v434, 1
          %v437 = vsel %vm435, %v390, 0.0
          %v438 = vsel %vm436, %v391, 0.0
          %s439 = scalar_lea.vmem [#allocation8], 3
          %v440 = vld [vmem:[%s439] ss:$8 sm:$0x3]
          %vm441 = vcmp.ne.f32.partialorder %v440, 0.0
          %v442 = vsel %vm441, 1, 0
          %v443 = vlaneseq
          %v444 = vshrl.u32 %v443, 7
          %v445 = vsub.s32 0, %v444
          %v446 = vrot.slane %v442, %v445
          %v447 = vlaneseq
          %v448 = vshrl.u32 %v447, 7
          %v449 = vsub.s32 1, %v448
          %v450 = vrot.slane %v442, %v449
          %vm451 = vcmp.eq.s32.totalorder %v446, 1
          %vm452 = vcmp.eq.s32.totalorder %v450, 1
          %v453 = vsel %vm451, %v390, 0.0
          %v454 = vsel %vm452, %v391, 0.0
          %s455 = scalar_lea.vmem [#allocation8], 4
          %v456 = vld [vmem:[%s455] ss:$8 sm:$0x3]
          %vm457 = vcmp.ne.f32.partialorder %v456, 0.0
          %v458 = vsel %vm457, 1, 0
          %v459 = vlaneseq
          %v460 = vshrl.u32 %v459, 7
          %v461 = vsub.s32 0, %v460
          %v462 = vrot.slane %v458, %v461
          %v463 = vlaneseq
          %v464 = vshrl.u32 %v463, 7
          %v465 = vsub.s32 1, %v464
          %v466 = vrot.slane %v458, %v465
          %vm467 = vcmp.eq.s32.totalorder %v462, 1
          %vm468 = vcmp.eq.s32.totalorder %v466, 1
          %v469 = vsel %vm467, %v390, 0.0
          %v470 = vsel %vm468, %v391, 0.0
          %s471 = scalar_lea.vmem [#allocation8], 5
          %v472 = vld [vmem:[%s471] ss:$8 sm:$0x3]
          %vm473 = vcmp.ne.f32.partialorder %v472, 0.0
          %v474 = vsel %vm473, 1, 0
          %v475 = vlaneseq
          %v476 = vshrl.u32 %v475, 7
          %v477 = vsub.s32 0, %v476
          %v478 = vrot.slane %v474, %v477
          %v479 = vlaneseq
          %v480 = vshrl.u32 %v479, 7
          %v481 = vsub.s32 1, %v480
          %v482 = vrot.slane %v474, %v481
          %vm483 = vcmp.eq.s32.totalorder %v478, 1
          %vm484 = vcmp.eq.s32.totalorder %v482, 1
          %v485 = vsel %vm483, %v390, 0.0
          %v486 = vsel %vm484, %v391, 0.0
          %s487 = scalar_lea.vmem [#allocation8], 6
          %v488 = vld [vmem:[%s487] ss:$8 sm:$0x3]
          %vm489 = vcmp.ne.f32.partialorder %v488, 0.0
          %v490 = vsel %vm489, 1, 0
          %v491 = vlaneseq
          %v492 = vshrl.u32 %v491, 7
          %v493 = vsub.s32 0, %v492
          %v494 = vrot.slane %v490, %v493
          %v495 = vlaneseq
          %v496 = vshrl.u32 %v495, 7
          %v497 = vsub.s32 1, %v496
          %v498 = vrot.slane %v490, %v497
          %vm499 = vcmp.eq.s32.totalorder %v494, 1
          %vm500 = vcmp.eq.s32.totalorder %v498, 1
          %v501 = vsel %vm499, %v390, 0.0
          %v502 = vsel %vm500, %v391, 0.0
          %v503 = vlaneseq
          %v504 = vshrl.u32 %v503, 7
          %vm505 = vcmp.lt.s32.totalorder %v504, 1
          %506 = vrot.lane.b32.xlu0 %v405, 51
          %v507 = vpop.permute.xlu0 %506
          %508 = vrot.lane.b32.xlu0 %v406, 51
          %v509 = vpop.permute.xlu0 %508
          %v510 = vlaneseq
          %v511 = vand.u32 %v510, 127
          %vm512 = vcmp.lt.s32.totalorder %v511, 51
          %v513 = vsel %vm512, %v507, %v509
          %v514 = vsel %vm512, %v509, %v507
          %s515 = sld [smem:[#allocation4]]
          %s516 = sld [smem:[#allocation4 + $0x31]]
          %v517 = vstv %s515
          %v518 = vstv %s516
          %v519 = vsel %vm505, %v517, %v518
          %v520 = vmul.f32 %v514, %v519
          %v521 = vmul.f32 %v513, %v519
          %v522 = vadd.f32 %v520, 0.0
          %v523 = vadd.f32 %v521, 0.0
          %524 = vrot.lane.b32.xlu0 %v421, 50
          %v525 = vpop.permute.xlu0 %524
          %526 = vrot.lane.b32.xlu0 %v422, 50
          %v527 = vpop.permute.xlu0 %526
          %vm528 = vcmp.lt.s32.totalorder %v511, 50
          %v529 = vsel %vm528, %v525, %v527
          %v530 = vsel %vm528, %v527, %v525
          %s531 = sld [smem:[#allocation4 + $0x1]]
          %s532 = sld [smem:[#allocation4 + $0x32]]
          %v533 = vstv %s531
          %v534 = vstv %s532
          %v535 = vsel %vm505, %v533, %v534
          %v536 = vmul.f32 %v530, %v535
          %v537 = vmul.f32 %v529, %v535
          %v538 = vadd.f32 %v536, 0.0
          %v539 = vadd.f32 %v537, 0.0
          %540 = vrot.lane.b32.xlu0 %v437, 49
          %v541 = vpop.permute.xlu0 %540
          %542 = vrot.lane.b32.xlu0 %v438, 49
          %v543 = vpop.permute.xlu0 %542
          %vm544 = vcmp.lt.s32.totalorder %v511, 49
          %v545 = vsel %vm544, %v541, %v543
          %v546 = vsel %vm544, %v543, %v541
          %s547 = sld [smem:[#allocation4 + $0x2]]
          %s548 = sld [smem:[#allocation4 + $0x33]]
          %v549 = vstv %s547
          %v550 = vstv %s548
          %v551 = vsel %vm505, %v549, %v550
          %v552 = vmul.f32 %v546, %v551
          %v553 = vmul.f32 %v545, %v551
          %v554 = vadd.f32 %v522, %v552
          %v555 = vadd.f32 %v523, %v553
          %556 = vrot.lane.b32.xlu0 %v453, 48
          %v557 = vpop.permute.xlu0 %556
          %558 = vrot.lane.b32.xlu0 %v454, 48
          %v559 = vpop.permute.xlu0 %558
          %vm560 = vcmp.lt.s32.totalorder %v511, 48
          %v561 = vsel %vm560, %v557, %v559
          %v562 = vsel %vm560, %v559, %v557
          %s563 = sld [smem:[#allocation4 + $0x3]]
          %s564 = sld [smem:[#allocation4 + $0x34]]
          %v565 = vstv %s563
          %v566 = vstv %s564
          %v567 = vsel %vm505, %v565, %v566
          %v568 = vmul.f32 %v562, %v567
          %v569 = vmul.f32 %v561, %v567
          %v570 = vadd.f32 %v538, %v568
          %v571 = vadd.f32 %v539, %v569
          %572 = vrot.lane.b32.xlu0 %v469, 47
          %v573 = vpop.permute.xlu0 %572
          %574 = vrot.lane.b32.xlu0 %v470, 47
          %v575 = vpop.permute.xlu0 %574
          %vm576 = vcmp.lt.s32.totalorder %v511, 47
          %v577 = vsel %vm576, %v573, %v575
          %v578 = vsel %vm576, %v575, %v573
          %s579 = sld [smem:[#allocation4 + $0x4]]
          %s580 = sld [smem:[#allocation4 + $0x35]]
          %v581 = vstv %s579
          %v582 = vstv %s580
          %v583 = vsel %vm505, %v581, %v582
          %v584 = vmul.f32 %v578, %v583
          %v585 = vmul.f32 %v577, %v583
          %v586 = vadd.f32 %v554, %v584
          %v587 = vadd.f32 %v555, %v585
          %588 = vrot.lane.b32.xlu0 %v485, 46
          %v589 = vpop.permute.xlu0 %588
          %590 = vrot.lane.b32.xlu0 %v486, 46
          %v591 = vpop.permute.xlu0 %590
          %vm592 = vcmp.lt.s32.totalorder %v511, 46
          %v593 = vsel %vm592, %v589, %v591
          %v594 = vsel %vm592, %v591, %v589
          %s595 = sld [smem:[#allocation4 + $0x5]]
          %s596 = sld [smem:[#allocation4 + $0x36]]
          %v597 = vstv %s595
          %v598 = vstv %s596
          %v599 = vsel %vm505, %v597, %v598
          %v600 = vmul.f32 %v594, %v599
          %v601 = vmul.f32 %v593, %v599
          %v602 = vadd.f32 %v570, %v600
          %v603 = vadd.f32 %v571, %v601
          %604 = vrot.lane.b32.xlu0 %v501, 45
          %v605 = vpop.permute.xlu0 %604
          %606 = vrot.lane.b32.xlu0 %v502, 45
          %v607 = vpop.permute.xlu0 %606
          %vm608 = vcmp.lt.s32.totalorder %v511, 45
          %v609 = vsel %vm608, %v605, %v607
          %v610 = vsel %vm608, %v607, %v605
          %s611 = sld [smem:[#allocation4 + $0x6]]
          %s612 = sld [smem:[#allocation4 + $0x37]]
          %v613 = vstv %s611
          %v614 = vstv %s612
          %v615 = vsel %vm505, %v613, %v614
          %v616 = vmul.f32 %v610, %v615
          %v617 = vmul.f32 %v609, %v615
          %v618 = vadd.f32 %v586, %v616
          %v619 = vadd.f32 %v587, %v617
          %s620 = scalar_lea.vmem [#allocation8], 7
          %v621 = vld [vmem:[%s620] ss:$8 sm:$0x3]
          %vm622 = vcmp.ne.f32.partialorder %v621, 0.0
          %v623 = vadd.f32 %v618, %v602
          %v624 = vadd.f32 %v619, %v603
          %v625 = vsel %vm622, 1, 0
          %v626 = vlaneseq
          %v627 = vshrl.u32 %v626, 7
          %v628 = vsub.s32 0, %v627
          %v629 = vrot.slane %v625, %v628
          %v630 = vlaneseq
          %v631 = vshrl.u32 %v630, 7
          %v632 = vsub.s32 1, %v631
          %v633 = vrot.slane %v625, %v632
          %vm634 = vcmp.eq.s32.totalorder %v629, 1
          %vm635 = vcmp.eq.s32.totalorder %v633, 1
          %v636 = vsel %vm634, %v623, 0.0
          %v637 = vsel %vm635, %v624, 0.0
          %v638 = vadd.f32 %v636, 0.0
          %v639 = vadd.f32 %v637, 0.0
          %640 = vrot.lane.b32.xlu0 %v405, 35
          %v641 = vpop.permute.xlu0 %640
          %642 = vrot.lane.b32.xlu0 %v406, 35
          %v643 = vpop.permute.xlu0 %642
          %vm644 = vcmp.lt.s32.totalorder %v511, 35
          %v645 = vsel %vm644, %v641, %v643
          %v646 = vsel %vm644, %v643, %v641
          %s647 = sld [smem:[#allocation4 + $0x7]]
          %s648 = sld [smem:[#allocation4 + $0x38]]
          %v649 = vstv %s647
          %v650 = vstv %s648
          %v651 = vsel %vm505, %v649, %v650
          %v652 = vmul.f32 %v646, %v651
          %v653 = vmul.f32 %v645, %v651
          %v654 = vadd.f32 %v652, 0.0
          %v655 = vadd.f32 %v653, 0.0
          %656 = vrot.lane.b32.xlu0 %v421, 34
          %v657 = vpop.permute.xlu0 %656
          %658 = vrot.lane.b32.xlu0 %v422, 34
          %v659 = vpop.permute.xlu0 %658
          %vm660 = vcmp.lt.s32.totalorder %v511, 34
          %v661 = vsel %vm660, %v657, %v659
          %v662 = vsel %vm660, %v659, %v657
          %s663 = sld [smem:[#allocation4 + $0x8]]
          %s664 = sld [smem:[#allocation4 + $0x39]]
          %v665 = vstv %s663
          %v666 = vstv %s664
          %v667 = vsel %vm505, %v665, %v666
          %v668 = vmul.f32 %v662, %v667
          %v669 = vmul.f32 %v661, %v667
          %v670 = vadd.f32 %v668, 0.0
          %v671 = vadd.f32 %v669, 0.0
          %672 = vrot.lane.b32.xlu0 %v437, 33
          %v673 = vpop.permute.xlu0 %672
          %674 = vrot.lane.b32.xlu0 %v438, 33
          %v675 = vpop.permute.xlu0 %674
          %vm676 = vcmp.lt.s32.totalorder %v511, 33
          %v677 = vsel %vm676, %v673, %v675
          %v678 = vsel %vm676, %v675, %v673
          %s679 = sld [smem:[#allocation4 + $0x9]]
          %s680 = sld [smem:[#allocation4 + $0x3a]]
          %v681 = vstv %s679
          %v682 = vstv %s680
          %v683 = vsel %vm505, %v681, %v682
          %v684 = vmul.f32 %v678, %v683
          %v685 = vmul.f32 %v677, %v683
          %v686 = vadd.f32 %v654, %v684
          %v687 = vadd.f32 %v655, %v685
          %688 = vrot.lane.b32.xlu0 %v453, 32
          %v689 = vpop.permute.xlu0 %688
          %690 = vrot.lane.b32.xlu0 %v454, 32
          %v691 = vpop.permute.xlu0 %690
          %vm692 = vcmp.lt.s32.totalorder %v511, 32
          %v693 = vsel %vm692, %v689, %v691
          %v694 = vsel %vm692, %v691, %v689
          %s695 = sld [smem:[#allocation4 + $0xa]]
          %s696 = sld [smem:[#allocation4 + $0x3b]]
          %v697 = vstv %s695
          %v698 = vstv %s696
          %v699 = vsel %vm505, %v697, %v698
          %v700 = vmul.f32 %v694, %v699
          %v701 = vmul.f32 %v693, %v699
          %v702 = vadd.f32 %v670, %v700
          %v703 = vadd.f32 %v671, %v701
          %704 = vrot.lane.b32.xlu0 %v469, 31
          %v705 = vpop.permute.xlu0 %704
          %706 = vrot.lane.b32.xlu0 %v470, 31
          %v707 = vpop.permute.xlu0 %706
          %vm708 = vcmp.lt.s32.totalorder %v511, 31
          %v709 = vsel %vm708, %v705, %v707
          %v710 = vsel %vm708, %v707, %v705
          %s711 = sld [smem:[#allocation4 + $0xb]]
          %s712 = sld [smem:[#allocation4 + $0x3c]]
          %v713 = vstv %s711
          %v714 = vstv %s712
          %v715 = vsel %vm505, %v713, %v714
          %v716 = vmul.f32 %v710, %v715
          %v717 = vmul.f32 %v709, %v715
          %v718 = vadd.f32 %v686, %v716
          %v719 = vadd.f32 %v687, %v717
          %720 = vrot.lane.b32.xlu0 %v485, 30
          %v721 = vpop.permute.xlu0 %720
          %722 = vrot.lane.b32.xlu0 %v486, 30
          %v723 = vpop.permute.xlu0 %722
          %vm724 = vcmp.lt.s32.totalorder %v511, 30
          %v725 = vsel %vm724, %v721, %v723
          %v726 = vsel %vm724, %v723, %v721
          %s727 = sld [smem:[#allocation4 + $0xc]]
          %s728 = sld [smem:[#allocation4 + $0x3d]]
          %v729 = vstv %s727
          %v730 = vstv %s728
          %v731 = vsel %vm505, %v729, %v730
          %v732 = vmul.f32 %v726, %v731
          %v733 = vmul.f32 %v725, %v731
          %v734 = vadd.f32 %v702, %v732
          %v735 = vadd.f32 %v703, %v733
          %736 = vrot.lane.b32.xlu0 %v501, 29
          %v737 = vpop.permute.xlu0 %736
          %738 = vrot.lane.b32.xlu0 %v502, 29
          %v739 = vpop.permute.xlu0 %738
          %vm740 = vcmp.lt.s32.totalorder %v511, 29
          %v741 = vsel %vm740, %v737, %v739
          %v742 = vsel %vm740, %v739, %v737
          %s743 = sld [smem:[#allocation4 + $0xd]]
          %s744 = sld [smem:[#allocation4 + $0x3e]]
          %v745 = vstv %s743
          %v746 = vstv %s744
          %v747 = vsel %vm505, %v745, %v746
          %v748 = vmul.f32 %v742, %v747
          %v749 = vmul.f32 %v741, %v747
          %v750 = vadd.f32 %v718, %v748
          %v751 = vadd.f32 %v719, %v749
          %s752 = scalar_lea.vmem [#allocation8], 16
          %v753 = vld [vmem:[%s752] ss:$8 sm:$0x3]
          %vm754 = vcmp.ne.f32.partialorder %v753, 0.0
          %v755 = vadd.f32 %v750, %v734
          %v756 = vadd.f32 %v751, %v735
          %v757 = vsel %vm754, 1, 0
          %v758 = vlaneseq
          %v759 = vshrl.u32 %v758, 7
          %v760 = vsub.s32 0, %v759
          %v761 = vrot.slane %v757, %v760
          %v762 = vlaneseq
          %v763 = vshrl.u32 %v762, 7
          %v764 = vsub.s32 1, %v763
          %v765 = vrot.slane %v757, %v764
          %vm766 = vcmp.eq.s32.totalorder %v761, 1
          %vm767 = vcmp.eq.s32.totalorder %v765, 1
          %v768 = vsel %vm766, %v755, 0.0
          %v769 = vsel %vm767, %v756, 0.0
          %v770 = vadd.f32 %v638, %v768
          %v771 = vadd.f32 %v639, %v769
          %772 = vrot.lane.b32.xlu0 %v405, 19
          %v773 = vpop.permute.xlu0 %772
          %774 = vrot.lane.b32.xlu0 %v406, 19
          %v775 = vpop.permute.xlu0 %774
          %vm776 = vcmp.lt.s32.totalorder %v511, 19
          %v777 = vsel %vm776, %v773, %v775
          %v778 = vsel %vm776, %v775, %v773
          %s779 = sld [smem:[#allocation4 + $0xe]]
          %s780 = sld [smem:[#allocation4 + $0x3f]]
          %v781 = vstv %s779
          %v782 = vstv %s780
          %v783 = vsel %vm505, %v781, %v782
          %v784 = vmul.f32 %v778, %v783
          %v785 = vmul.f32 %v777, %v783
          %v786 = vadd.f32 %v784, 0.0
          %v787 = vadd.f32 %v785, 0.0
          %788 = vrot.lane.b32.xlu0 %v421, 18
          %v789 = vpop.permute.xlu0 %788
          %790 = vrot.lane.b32.xlu0 %v422, 18
          %v791 = vpop.permute.xlu0 %790
          %vm792 = vcmp.lt.s32.totalorder %v511, 18
          %v793 = vsel %vm792, %v789, %v791
          %v794 = vsel %vm792, %v791, %v789
          %s795 = sld [smem:[#allocation4 + $0xf]]
          %s796 = sld [smem:[#allocation4 + $0x40]]
          %v797 = vstv %s795
          %v798 = vstv %s796
          %v799 = vsel %vm505, %v797, %v798
          %v800 = vmul.f32 %v794, %v799
          %v801 = vmul.f32 %v793, %v799
          %v802 = vadd.f32 %v800, 0.0
          %v803 = vadd.f32 %v801, 0.0
          %804 = vrot.lane.b32.xlu0 %v437, 17
          %v805 = vpop.permute.xlu0 %804
          %806 = vrot.lane.b32.xlu0 %v438, 17
          %v807 = vpop.permute.xlu0 %806
          %vm808 = vcmp.lt.s32.totalorder %v511, 17
          %v809 = vsel %vm808, %v805, %v807
          %v810 = vsel %vm808, %v807, %v805
          %s811 = sld [smem:[#allocation4 + $0x10]]
          %s812 = sld [smem:[#allocation4 + $0x41]]
          %v813 = vstv %s811
          %v814 = vstv %s812
          %v815 = vsel %vm505, %v813, %v814
          %v816 = vmul.f32 %v810, %v815
          %v817 = vmul.f32 %v809, %v815
          %v818 = vadd.f32 %v786, %v816
          %v819 = vadd.f32 %v787, %v817
          %820 = vrot.lane.b32.xlu0 %v453, 16
          %v821 = vpop.permute.xlu0 %820
          %822 = vrot.lane.b32.xlu0 %v454, 16
          %v823 = vpop.permute.xlu0 %822
          %vm824 = vcmp.lt.s32.totalorder %v511, 16
          %v825 = vsel %vm824, %v821, %v823
          %v826 = vsel %vm824, %v823, %v821
          %s827 = sld [smem:[#allocation4 + $0x11]]
          %s828 = sld [smem:[#allocation4 + $0x42]]
          %v829 = vstv %s827
          %v830 = vstv %s828
          %v831 = vsel %vm505, %v829, %v830
          %v832 = vmul.f32 %v826, %v831
          %v833 = vmul.f32 %v825, %v831
          %v834 = vadd.f32 %v802, %v832
          %v835 = vadd.f32 %v803, %v833
          %836 = vrot.lane.b32.xlu0 %v469, 15
          %v837 = vpop.permute.xlu0 %836
          %838 = vrot.lane.b32.xlu0 %v470, 15
          %v839 = vpop.permute.xlu0 %838
          %vm840 = vcmp.lt.s32.totalorder %v511, 15
          %v841 = vsel %vm840, %v837, %v839
          %v842 = vsel %vm840, %v839, %v837
          %s843 = sld [smem:[#allocation4 + $0x12]]
          %s844 = sld [smem:[#allocation4 + $0x43]]
          %v845 = vstv %s843
          %v846 = vstv %s844
          %v847 = vsel %vm505, %v845, %v846
          %v848 = vmul.f32 %v842, %v847
          %v849 = vmul.f32 %v841, %v847
          %v850 = vadd.f32 %v818, %v848
          %v851 = vadd.f32 %v819, %v849
          %852 = vrot.lane.b32.xlu0 %v485, 14
          %v853 = vpop.permute.xlu0 %852
          %854 = vrot.lane.b32.xlu0 %v486, 14
          %v855 = vpop.permute.xlu0 %854
          %vm856 = vcmp.lt.s32.totalorder %v511, 14
          %v857 = vsel %vm856, %v853, %v855
          %v858 = vsel %vm856, %v855, %v853
          %s859 = sld [smem:[#allocation4 + $0x13]]
          %s860 = sld [smem:[#allocation4 + $0x44]]
          %v861 = vstv %s859
          %v862 = vstv %s860
          %v863 = vsel %vm505, %v861, %v862
          %v864 = vmul.f32 %v858, %v863
          %v865 = vmul.f32 %v857, %v863
          %v866 = vadd.f32 %v834, %v864
          %v867 = vadd.f32 %v835, %v865
          %868 = vrot.lane.b32.xlu0 %v501, 13
          %v869 = vpop.permute.xlu0 %868
          %870 = vrot.lane.b32.xlu0 %v502, 13
          %v871 = vpop.permute.xlu0 %870
          %vm872 = vcmp.lt.s32.totalorder %v511, 13
          %v873 = vsel %vm872, %v869, %v871
          %v874 = vsel %vm872, %v871, %v869
          %s875 = sld [smem:[#allocation4 + $0x14]]
          %s876 = sld [smem:[#allocation4 + $0x45]]
          %v877 = vstv %s875
          %v878 = vstv %s876
          %v879 = vsel %vm505, %v877, %v878
          %v880 = vmul.f32 %v874, %v879
          %v881 = vmul.f32 %v873, %v879
          %v882 = vadd.f32 %v850, %v880
          %v883 = vadd.f32 %v851, %v881
          %s884 = scalar_lea.vmem [#allocation8], 17
          %v885 = vld [vmem:[%s884] ss:$8 sm:$0x3]
          %vm886 = vcmp.ne.f32.partialorder %v885, 0.0
          %v887 = vadd.f32 %v882, %v866
          %v888 = vadd.f32 %v883, %v867
          %v889 = vsel %vm886, 1, 0
          %v890 = vlaneseq
          %v891 = vshrl.u32 %v890, 7
          %v892 = vsub.s32 0, %v891
          %v893 = vrot.slane %v889, %v892
          %v894 = vlaneseq
          %v895 = vshrl.u32 %v894, 7
          %v896 = vsub.s32 1, %v895
          %v897 = vrot.slane %v889, %v896
          %vm898 = vcmp.eq.s32.totalorder %v893, 1
          %vm899 = vcmp.eq.s32.totalorder %v897, 1
          %v900 = vsel %vm898, %v887, 0.0
          %v901 = vsel %vm899, %v888, 0.0
          %v902 = vadd.f32 %v770, %v900
          %v903 = vadd.f32 %v771, %v901
          %904 = vrot.lane.b32.xlu0 %v405, 3
          %v905 = vpop.permute.xlu0 %904
          %906 = vrot.lane.b32.xlu0 %v406, 3
          %v907 = vpop.permute.xlu0 %906
          %vm908 = vcmp.lt.s32.totalorder %v511, 3
          %v909 = vsel %vm908, %v905, %v907
          %v910 = vsel %vm908, %v907, %v905
          %s911 = sld [smem:[#allocation4 + $0x15]]
          %s912 = sld [smem:[#allocation4 + $0x46]]
          %v913 = vstv %s911
          %v914 = vstv %s912
          %v915 = vsel %vm505, %v913, %v914
          %v916 = vmul.f32 %v910, %v915
          %v917 = vmul.f32 %v909, %v915
          %v918 = vadd.f32 %v916, 0.0
          %v919 = vadd.f32 %v917, 0.0
          %920 = vrot.lane.b32.xlu0 %v421, 2
          %v921 = vpop.permute.xlu0 %920
          %922 = vrot.lane.b32.xlu0 %v422, 2
          %v923 = vpop.permute.xlu0 %922
          %vm924 = vcmp.lt.s32.totalorder %v511, 2
          %v925 = vsel %vm924, %v921, %v923
          %v926 = vsel %vm924, %v923, %v921
          %s927 = sld [smem:[#allocation4 + $0x16]]
          %s928 = sld [smem:[#allocation4 + $0x47]]
          %v929 = vstv %s927
          %v930 = vstv %s928
          %v931 = vsel %vm505, %v929, %v930
          %v932 = vmul.f32 %v926, %v931
          %v933 = vmul.f32 %v925, %v931
          %v934 = vadd.f32 %v932, 0.0
          %v935 = vadd.f32 %v933, 0.0
          %936 = vrot.lane.b32.xlu0 %v437, 1
          %v937 = vpop.permute.xlu0 %936
          %938 = vrot.lane.b32.xlu0 %v438, 1
          %v939 = vpop.permute.xlu0 %938
          %vm940 = vcmp.lt.s32.totalorder %v511, 1
          %v941 = vsel %vm940, %v937, %v939
          %v942 = vsel %vm940, %v939, %v937
          %s943 = sld [smem:[#allocation4 + $0x17]]
          %s944 = sld [smem:[#allocation4 + $0x48]]
          %v945 = vstv %s943
          %v946 = vstv %s944
          %v947 = vsel %vm505, %v945, %v946
          %v948 = vmul.f32 %v942, %v947
          %v949 = vmul.f32 %v941, %v947
          %v950 = vadd.f32 %v918, %v948
          %v951 = vadd.f32 %v919, %v949
          %s952 = sld [smem:[#allocation4 + $0x18]]
          %s953 = sld [smem:[#allocation4 + $0x49]]
          %v954 = vstv %s952
          %v955 = vstv %s953
          %v956 = vsel %vm505, %v954, %v955
          %v957 = vmul.f32 %v453, %v956
          %v958 = vmul.f32 %v454, %v956
          %v959 = vadd.f32 %v934, %v957
          %v960 = vadd.f32 %v935, %v958
          %961 = vrot.lane.b32.xlu0 %v469, 127
          %v962 = vpop.permute.xlu0 %961
          %963 = vrot.lane.b32.xlu0 %v470, 127
          %v964 = vpop.permute.xlu0 %963
          %vm965 = vcmp.lt.s32.totalorder %v511, 127
          %v966 = vsel %vm965, %v962, %v964
          %v967 = vsel %vm965, %v964, %v962
          %s968 = sld [smem:[#allocation4 + $0x19]]
          %s969 = sld [smem:[#allocation4 + $0x4a]]
          %v970 = vstv %s968
          %v971 = vstv %s969
          %v972 = vsel %vm505, %v970, %v971
          %v973 = vmul.f32 %v966, %v972
          %v974 = vmul.f32 %v967, %v972
          %v975 = vadd.f32 %v950, %v973
          %v976 = vadd.f32 %v951, %v974
          %977 = vrot.lane.b32.xlu0 %v485, 126
          %v978 = vpop.permute.xlu0 %977
          %979 = vrot.lane.b32.xlu0 %v486, 126
          %v980 = vpop.permute.xlu0 %979
          %vm981 = vcmp.lt.s32.totalorder %v511, 126
          %v982 = vsel %vm981, %v978, %v980
          %v983 = vsel %vm981, %v980, %v978
          %s984 = sld [smem:[#allocation4 + $0x1a]]
          %s985 = sld [smem:[#allocation4 + $0x4b]]
          %v986 = vstv %s984
          %v987 = vstv %s985
          %v988 = vsel %vm505, %v986, %v987
          %v989 = vmul.f32 %v982, %v988
          %v990 = vmul.f32 %v983, %v988
          %v991 = vadd.f32 %v959, %v989
          %v992 = vadd.f32 %v960, %v990
          %993 = vrot.lane.b32.xlu0 %v501, 125
          %v994 = vpop.permute.xlu0 %993
          %995 = vrot.lane.b32.xlu0 %v502, 125
          %v996 = vpop.permute.xlu0 %995
          %vm997 = vcmp.lt.s32.totalorder %v511, 125
          %v998 = vsel %vm997, %v994, %v996
          %v999 = vsel %vm997, %v996, %v994
          %s1000 = sld [smem:[#allocation4 + $0x1b]]
          %s1001 = sld [smem:[#allocation4 + $0x4c]]
          %v1002 = vstv %s1000
          %v1003 = vstv %s1001
          %v1004 = vsel %vm505, %v1002, %v1003
          %v1005 = vmul.f32 %v998, %v1004
          %v1006 = vmul.f32 %v999, %v1004
          %v1007 = vadd.f32 %v975, %v1005
          %v1008 = vadd.f32 %v976, %v1006
          %s1009 = scalar_lea.vmem [#allocation8], 18
          %v1010 = vld [vmem:[%s1009] ss:$8 sm:$0x3]
          %vm1011 = vcmp.ne.f32.partialorder %v1010, 0.0
          %v1012 = vadd.f32 %v1007, %v991
          %v1013 = vadd.f32 %v1008, %v992
          %v1014 = vsel %vm1011, 1, 0
          %v1015 = vlaneseq
          %v1016 = vshrl.u32 %v1015, 7
          %v1017 = vsub.s32 0, %v1016
          %v1018 = vrot.slane %v1014, %v1017
          %v1019 = vlaneseq
          %v1020 = vshrl.u32 %v1019, 7
          %v1021 = vsub.s32 1, %v1020
          %v1022 = vrot.slane %v1014, %v1021
          %vm1023 = vcmp.eq.s32.totalorder %v1018, 1
          %vm1024 = vcmp.eq.s32.totalorder %v1022, 1
          %v1025 = vsel %vm1023, %v1012, 0.0
          %v1026 = vsel %vm1024, %v1013, 0.0
          %v1027 = vadd.f32 %v902, %v1025
          %v1028 = vadd.f32 %v903, %v1026
          %1029 = vrot.lane.b32.xlu0 %v405, 115
          %v1030 = vpop.permute.xlu0 %1029
          %1031 = vrot.lane.b32.xlu0 %v406, 115
          %v1032 = vpop.permute.xlu0 %1031
          %vm1033 = vcmp.lt.s32.totalorder %v511, 115
          %v1034 = vsel %vm1033, %v1030, %v1032
          %v1035 = vsel %vm1033, %v1032, %v1030
          %s1036 = sld [smem:[#allocation4 + $0x1c]]
          %s1037 = sld [smem:[#allocation4 + $0x4d]]
          %v1038 = vstv %s1036
          %v1039 = vstv %s1037
          %v1040 = vsel %vm505, %v1038, %v1039
          %v1041 = vmul.f32 %v1034, %v1040
          %v1042 = vmul.f32 %v1035, %v1040
          %v1043 = vadd.f32 %v1041, 0.0
          %v1044 = vadd.f32 %v1042, 0.0
          %1045 = vrot.lane.b32.xlu0 %v421, 114
          %v1046 = vpop.permute.xlu0 %1045
          %1047 = vrot.lane.b32.xlu0 %v422, 114
          %v1048 = vpop.permute.xlu0 %1047
          %vm1049 = vcmp.lt.s32.totalorder %v511, 114
          %v1050 = vsel %vm1049, %v1046, %v1048
          %v1051 = vsel %vm1049, %v1048, %v1046
          %s1052 = sld [smem:[#allocation4 + $0x1d]]
          %s1053 = sld [smem:[#allocation4 + $0x4e]]
          %v1054 = vstv %s1052
          %v1055 = vstv %s1053
          %v1056 = vsel %vm505, %v1054, %v1055
          %v1057 = vmul.f32 %v1050, %v1056
          %v1058 = vmul.f32 %v1051, %v1056
          %v1059 = vadd.f32 %v1057, 0.0
          %v1060 = vadd.f32 %v1058, 0.0
          %1061 = vrot.lane.b32.xlu0 %v437, 113
          %v1062 = vpop.permute.xlu0 %1061
          %1063 = vrot.lane.b32.xlu0 %v438, 113
          %v1064 = vpop.permute.xlu0 %1063
          %vm1065 = vcmp.lt.s32.totalorder %v511, 113
          %v1066 = vsel %vm1065, %v1062, %v1064
          %v1067 = vsel %vm1065, %v1064, %v1062
          %s1068 = sld [smem:[#allocation4 + $0x1e]]
          %s1069 = sld [smem:[#allocation4 + $0x4f]]
          %v1070 = vstv %s1068
          %v1071 = vstv %s1069
          %v1072 = vsel %vm505, %v1070, %v1071
          %v1073 = vmul.f32 %v1066, %v1072
          %v1074 = vmul.f32 %v1067, %v1072
          %v1075 = vadd.f32 %v1043, %v1073
          %v1076 = vadd.f32 %v1044, %v1074
          %1077 = vrot.lane.b32.xlu0 %v453, 112
          %v1078 = vpop.permute.xlu0 %1077
          %1079 = vrot.lane.b32.xlu0 %v454, 112
          %v1080 = vpop.permute.xlu0 %1079
          %vm1081 = vcmp.lt.s32.totalorder %v511, 112
          %v1082 = vsel %vm1081, %v1078, %v1080
          %v1083 = vsel %vm1081, %v1080, %v1078
          %s1084 = sld [smem:[#allocation4 + $0x1f]]
          %s1085 = sld [smem:[#allocation4 + $0x50]]
          %v1086 = vstv %s1084
          %v1087 = vstv %s1085
          %v1088 = vsel %vm505, %v1086, %v1087
          %v1089 = vmul.f32 %v1082, %v1088
          %v1090 = vmul.f32 %v1083, %v1088
          %v1091 = vadd.f32 %v1059, %v1089
          %v1092 = vadd.f32 %v1060, %v1090
          %1093 = vrot.lane.b32.xlu0 %v469, 111
          %v1094 = vpop.permute.xlu0 %1093
          %1095 = vrot.lane.b32.xlu0 %v470, 111
          %v1096 = vpop.permute.xlu0 %1095
          %vm1097 = vcmp.lt.s32.totalorder %v511, 111
          %v1098 = vsel %vm1097, %v1094, %v1096
          %v1099 = vsel %vm1097, %v1096, %v1094
          %s1100 = sld [smem:[#allocation4 + $0x20]]
          %s1101 = sld [smem:[#allocation4 + $0x51]]
          %v1102 = vstv %s1100
          %v1103 = vstv %s1101
          %v1104 = vsel %vm505, %v1102, %v1103
          %v1105 = vmul.f32 %v1098, %v1104
          %v1106 = vmul.f32 %v1099, %v1104
          %v1107 = vadd.f32 %v1075, %v1105
          %v1108 = vadd.f32 %v1076, %v1106
          %1109 = vrot.lane.b32.xlu0 %v485, 110
          %v1110 = vpop.permute.xlu0 %1109
          %1111 = vrot.lane.b32.xlu0 %v486, 110
          %v1112 = vpop.permute.xlu0 %1111
          %vm1113 = vcmp.lt.s32.totalorder %v511, 110
          %v1114 = vsel %vm1113, %v1110, %v1112
          %v1115 = vsel %vm1113, %v1112, %v1110
          %s1116 = sld [smem:[#allocation4 + $0x21]]
          %s1117 = sld [smem:[#allocation4 + $0x52]]
          %v1118 = vstv %s1116
          %v1119 = vstv %s1117
          %v1120 = vsel %vm505, %v1118, %v1119
          %v1121 = vmul.f32 %v1114, %v1120
          %v1122 = vmul.f32 %v1115, %v1120
          %v1123 = vadd.f32 %v1091, %v1121
          %v1124 = vadd.f32 %v1092, %v1122
          %1125 = vrot.lane.b32.xlu0 %v501, 109
          %v1126 = vpop.permute.xlu0 %1125
          %1127 = vrot.lane.b32.xlu0 %v502, 109
          %v1128 = vpop.permute.xlu0 %1127
          %vm1129 = vcmp.lt.s32.totalorder %v511, 109
          %v1130 = vsel %vm1129, %v1126, %v1128
          %v1131 = vsel %vm1129, %v1128, %v1126
          %s1132 = sld [smem:[#allocation4 + $0x22]]
          %s1133 = sld [smem:[#allocation4 + $0x53]]
          %v1134 = vstv %s1132
          %v1135 = vstv %s1133
          %v1136 = vsel %vm505, %v1134, %v1135
          %v1137 = vmul.f32 %v1130, %v1136
          %v1138 = vmul.f32 %v1131, %v1136
          %v1139 = vadd.f32 %v1107, %v1137
          %v1140 = vadd.f32 %v1108, %v1138
          %s1141 = scalar_lea.vmem [#allocation8], 19
          %v1142 = vld [vmem:[%s1141] ss:$8 sm:$0x3]
          %vm1143 = vcmp.ne.f32.partialorder %v1142, 0.0
          %v1144 = vadd.f32 %v1139, %v1123
          %v1145 = vadd.f32 %v1140, %v1124
          %v1146 = vsel %vm1143, 1, 0
          %v1147 = vlaneseq
          %v1148 = vshrl.u32 %v1147, 7
          %v1149 = vsub.s32 0, %v1148
          %v1150 = vrot.slane %v1146, %v1149
          %v1151 = vlaneseq
          %v1152 = vshrl.u32 %v1151, 7
          %v1153 = vsub.s32 1, %v1152
          %v1154 = vrot.slane %v1146, %v1153
          %vm1155 = vcmp.eq.s32.totalorder %v1150, 1
          %vm1156 = vcmp.eq.s32.totalorder %v1154, 1
          %v1157 = vsel %vm1155, %v1144, 0.0
          %v1158 = vsel %vm1156, %v1145, 0.0
          %v1159 = vadd.f32 %v1027, %v1157
          %v1160 = vadd.f32 %v1028, %v1158
          %1161 = vrot.lane.b32.xlu0 %v405, 99
          %v1162 = vpop.permute.xlu0 %1161
          %1163 = vrot.lane.b32.xlu0 %v406, 99
          %v1164 = vpop.permute.xlu0 %1163
          %vm1165 = vcmp.lt.s32.totalorder %v511, 99
          %v1166 = vsel %vm1165, %v1162, %v1164
          %v1167 = vsel %vm1165, %v1164, %v1162
          %s1168 = sld [smem:[#allocation4 + $0x23]]
          %s1169 = sld [smem:[#allocation4 + $0x54]]
          %v1170 = vstv %s1168
          %v1171 = vstv %s1169
          %v1172 = vsel %vm505, %v1170, %v1171
          %v1173 = vmul.f32 %v1166, %v1172
          %v1174 = vmul.f32 %v1167, %v1172
          %v1175 = vadd.f32 %v1173, 0.0
          %v1176 = vadd.f32 %v1174, 0.0
          %1177 = vrot.lane.b32.xlu0 %v421, 98
          %v1178 = vpop.permute.xlu0 %1177
          %1179 = vrot.lane.b32.xlu0 %v422, 98
          %v1180 = vpop.permute.xlu0 %1179
          %vm1181 = vcmp.lt.s32.totalorder %v511, 98
          %v1182 = vsel %vm1181, %v1178, %v1180
          %v1183 = vsel %vm1181, %v1180, %v1178
          %s1184 = sld [smem:[#allocation4 + $0x24]]
          %s1185 = sld [smem:[#allocation4 + $0x55]]
          %v1186 = vstv %s1184
          %v1187 = vstv %s1185
          %v1188 = vsel %vm505, %v1186, %v1187
          %v1189 = vmul.f32 %v1182, %v1188
          %v1190 = vmul.f32 %v1183, %v1188
          %v1191 = vadd.f32 %v1189, 0.0
          %v1192 = vadd.f32 %v1190, 0.0
          %1193 = vrot.lane.b32.xlu0 %v437, 97
          %v1194 = vpop.permute.xlu0 %1193
          %1195 = vrot.lane.b32.xlu0 %v438, 97
          %v1196 = vpop.permute.xlu0 %1195
          %vm1197 = vcmp.lt.s32.totalorder %v511, 97
          %v1198 = vsel %vm1197, %v1194, %v1196
          %v1199 = vsel %vm1197, %v1196, %v1194
          %s1200 = sld [smem:[#allocation4 + $0x25]]
          %s1201 = sld [smem:[#allocation4 + $0x56]]
          %v1202 = vstv %s1200
          %v1203 = vstv %s1201
          %v1204 = vsel %vm505, %v1202, %v1203
          %v1205 = vmul.f32 %v1198, %v1204
          %v1206 = vmul.f32 %v1199, %v1204
          %v1207 = vadd.f32 %v1175, %v1205
          %v1208 = vadd.f32 %v1176, %v1206
          %1209 = vrot.lane.b32.xlu0 %v453, 96
          %v1210 = vpop.permute.xlu0 %1209
          %1211 = vrot.lane.b32.xlu0 %v454, 96
          %v1212 = vpop.permute.xlu0 %1211
          %vm1213 = vcmp.lt.s32.totalorder %v511, 96
          %v1214 = vsel %vm1213, %v1210, %v1212
          %v1215 = vsel %vm1213, %v1212, %v1210
          %s1216 = sld [smem:[#allocation4 + $0x26]]
          %s1217 = sld [smem:[#allocation4 + $0x57]]
          %v1218 = vstv %s1216
          %v1219 = vstv %s1217
          %v1220 = vsel %vm505, %v1218, %v1219
          %v1221 = vmul.f32 %v1214, %v1220
          %v1222 = vmul.f32 %v1215, %v1220
          %v1223 = vadd.f32 %v1191, %v1221
          %v1224 = vadd.f32 %v1192, %v1222
          %1225 = vrot.lane.b32.xlu0 %v469, 95
          %v1226 = vpop.permute.xlu0 %1225
          %1227 = vrot.lane.b32.xlu0 %v470, 95
          %v1228 = vpop.permute.xlu0 %1227
          %vm1229 = vcmp.lt.s32.totalorder %v511, 95
          %v1230 = vsel %vm1229, %v1226, %v1228
          %v1231 = vsel %vm1229, %v1228, %v1226
          %s1232 = sld [smem:[#allocation4 + $0x27]]
          %s1233 = sld [smem:[#allocation4 + $0x58]]
          %v1234 = vstv %s1232
          %v1235 = vstv %s1233
          %v1236 = vsel %vm505, %v1234, %v1235
          %v1237 = vmul.f32 %v1230, %v1236
          %v1238 = vmul.f32 %v1231, %v1236
          %v1239 = vadd.f32 %v1207, %v1237
          %v1240 = vadd.f32 %v1208, %v1238
          %1241 = vrot.lane.b32.xlu0 %v485, 94
          %v1242 = vpop.permute.xlu0 %1241
          %1243 = vrot.lane.b32.xlu0 %v486, 94
          %v1244 = vpop.permute.xlu0 %1243
          %vm1245 = vcmp.lt.s32.totalorder %v511, 94
          %v1246 = vsel %vm1245, %v1242, %v1244
          %v1247 = vsel %vm1245, %v1244, %v1242
          %s1248 = sld [smem:[#allocation4 + $0x28]]
          %s1249 = sld [smem:[#allocation4 + $0x59]]
          %v1250 = vstv %s1248
          %v1251 = vstv %s1249
          %v1252 = vsel %vm505, %v1250, %v1251
          %v1253 = vmul.f32 %v1246, %v1252
          %v1254 = vmul.f32 %v1247, %v1252
          %v1255 = vadd.f32 %v1223, %v1253
          %v1256 = vadd.f32 %v1224, %v1254
          %1257 = vrot.lane.b32.xlu0 %v501, 93
          %v1258 = vpop.permute.xlu0 %1257
          %1259 = vrot.lane.b32.xlu0 %v502, 93
          %v1260 = vpop.permute.xlu0 %1259
          %vm1261 = vcmp.lt.s32.totalorder %v511, 93
          %v1262 = vsel %vm1261, %v1258, %v1260
          %v1263 = vsel %vm1261, %v1260, %v1258
          %s1264 = sld [smem:[#allocation4 + $0x29]]
          %s1265 = sld [smem:[#allocation4 + $0x5a]]
          %v1266 = vstv %s1264
          %v1267 = vstv %s1265
          %v1268 = vsel %vm505, %v1266, %v1267
          %v1269 = vmul.f32 %v1262, %v1268
          %v1270 = vmul.f32 %v1263, %v1268
          %v1271 = vadd.f32 %v1239, %v1269
          %v1272 = vadd.f32 %v1240, %v1270
          %s1273 = scalar_lea.vmem [#allocation8], 20
          %v1274 = vld [vmem:[%s1273] ss:$8 sm:$0x3]
          %vm1275 = vcmp.ne.f32.partialorder %v1274, 0.0
          %v1276 = vadd.f32 %v1271, %v1255
          %v1277 = vadd.f32 %v1272, %v1256
          %v1278 = vsel %vm1275, 1, 0
          %v1279 = vlaneseq
          %v1280 = vshrl.u32 %v1279, 7
          %v1281 = vsub.s32 0, %v1280
          %v1282 = vrot.slane %v1278, %v1281
          %v1283 = vlaneseq
          %v1284 = vshrl.u32 %v1283, 7
          %v1285 = vsub.s32 1, %v1284
          %v1286 = vrot.slane %v1278, %v1285
          %vm1287 = vcmp.eq.s32.totalorder %v1282, 1
          %vm1288 = vcmp.eq.s32.totalorder %v1286, 1
          %v1289 = vsel %vm1287, %v1276, 0.0
          %v1290 = vsel %vm1288, %v1277, 0.0
          %v1291 = vadd.f32 %v1159, %v1289
          %v1292 = vadd.f32 %v1160, %v1290
          %1293 = vrot.lane.b32.xlu0 %v405, 83
          %v1294 = vpop.permute.xlu0 %1293
          %1295 = vrot.lane.b32.xlu0 %v406, 83
          %v1296 = vpop.permute.xlu0 %1295
          %vm1297 = vcmp.lt.s32.totalorder %v511, 83
          %v1298 = vsel %vm1297, %v1294, %v1296
          %v1299 = vsel %vm1297, %v1296, %v1294
          %s1300 = sld [smem:[#allocation4 + $0x2a]]
          %s1301 = sld [smem:[#allocation4 + $0x5b]]
          %v1302 = vstv %s1300
          %v1303 = vstv %s1301
          %v1304 = vsel %vm505, %v1302, %v1303
          %v1305 = vmul.f32 %v1298, %v1304
          %v1306 = vmul.f32 %v1299, %v1304
          %v1307 = vadd.f32 %v1305, 0.0
          %v1308 = vadd.f32 %v1306, 0.0
          %1309 = vrot.lane.b32.xlu0 %v421, 82
          %v1310 = vpop.permute.xlu0 %1309
          %1311 = vrot.lane.b32.xlu0 %v422, 82
          %v1312 = vpop.permute.xlu0 %1311
          %vm1313 = vcmp.lt.s32.totalorder %v511, 82
          %v1314 = vsel %vm1313, %v1310, %v1312
          %v1315 = vsel %vm1313, %v1312, %v1310
          %s1316 = sld [smem:[#allocation4 + $0x2b]]
          %s1317 = sld [smem:[#allocation4 + $0x5c]]
          %v1318 = vstv %s1316
          %v1319 = vstv %s1317
          %v1320 = vsel %vm505, %v1318, %v1319
          %v1321 = vmul.f32 %v1314, %v1320
          %v1322 = vmul.f32 %v1315, %v1320
          %v1323 = vadd.f32 %v1321, 0.0
          %v1324 = vadd.f32 %v1322, 0.0
          %1325 = vrot.lane.b32.xlu0 %v437, 81
          %v1326 = vpop.permute.xlu0 %1325
          %1327 = vrot.lane.b32.xlu0 %v438, 81
          %v1328 = vpop.permute.xlu0 %1327
          %vm1329 = vcmp.lt.s32.totalorder %v511, 81
          %v1330 = vsel %vm1329, %v1326, %v1328
          %v1331 = vsel %vm1329, %v1328, %v1326
          %s1332 = sld [smem:[#allocation4 + $0x2c]]
          %s1333 = sld [smem:[#allocation4 + $0x5d]]
          %v1334 = vstv %s1332
          %v1335 = vstv %s1333
          %v1336 = vsel %vm505, %v1334, %v1335
          %v1337 = vmul.f32 %v1330, %v1336
          %v1338 = vmul.f32 %v1331, %v1336
          %v1339 = vadd.f32 %v1307, %v1337
          %v1340 = vadd.f32 %v1308, %v1338
          %1341 = vrot.lane.b32.xlu0 %v453, 80
          %v1342 = vpop.permute.xlu0 %1341
          %1343 = vrot.lane.b32.xlu0 %v454, 80
          %v1344 = vpop.permute.xlu0 %1343
          %vm1345 = vcmp.lt.s32.totalorder %v511, 80
          %v1346 = vsel %vm1345, %v1342, %v1344
          %v1347 = vsel %vm1345, %v1344, %v1342
          %s1348 = sld [smem:[#allocation4 + $0x2d]]
          %s1349 = sld [smem:[#allocation4 + $0x5e]]
          %v1350 = vstv %s1348
          %v1351 = vstv %s1349
          %v1352 = vsel %vm505, %v1350, %v1351
          %v1353 = vmul.f32 %v1346, %v1352
          %v1354 = vmul.f32 %v1347, %v1352
          %v1355 = vadd.f32 %v1323, %v1353
          %v1356 = vadd.f32 %v1324, %v1354
          %1357 = vrot.lane.b32.xlu0 %v469, 79
          %v1358 = vpop.permute.xlu0 %1357
          %1359 = vrot.lane.b32.xlu0 %v470, 79
          %v1360 = vpop.permute.xlu0 %1359
          %vm1361 = vcmp.lt.s32.totalorder %v511, 79
          %v1362 = vsel %vm1361, %v1358, %v1360
          %v1363 = vsel %vm1361, %v1360, %v1358
          %s1364 = sld [smem:[#allocation4 + $0x2e]]
          %s1365 = sld [smem:[#allocation4 + $0x5f]]
          %v1366 = vstv %s1364
          %v1367 = vstv %s1365
          %v1368 = vsel %vm505, %v1366, %v1367
          %v1369 = vmul.f32 %v1362, %v1368
          %v1370 = vmul.f32 %v1363, %v1368
          %v1371 = vadd.f32 %v1339, %v1369
          %v1372 = vadd.f32 %v1340, %v1370
          %1373 = vrot.lane.b32.xlu0 %v485, 78
          %v1374 = vpop.permute.xlu0 %1373
          %1375 = vrot.lane.b32.xlu0 %v486, 78
          %v1376 = vpop.permute.xlu0 %1375
          %vm1377 = vcmp.lt.s32.totalorder %v511, 78
          %v1378 = vsel %vm1377, %v1374, %v1376
          %v1379 = vsel %vm1377, %v1376, %v1374
          %s1380 = sld [smem:[#allocation4 + $0x2f]]
          %s1381 = sld [smem:[#allocation4 + $0x60]]
          %v1382 = vstv %s1380
          %v1383 = vstv %s1381
          %v1384 = vsel %vm505, %v1382, %v1383
          %v1385 = vmul.f32 %v1378, %v1384
          %v1386 = vmul.f32 %v1379, %v1384
          %v1387 = vadd.f32 %v1355, %v1385
          %v1388 = vadd.f32 %v1356, %v1386
          %1389 = vrot.lane.b32.xlu0 %v501, 77
          %v1390 = vpop.permute.xlu0 %1389
          %1391 = vrot.lane.b32.xlu0 %v502, 77
          %v1392 = vpop.permute.xlu0 %1391
          %vm1393 = vcmp.lt.s32.totalorder %v511, 77
          %v1394 = vsel %vm1393, %v1390, %v1392
          %v1395 = vsel %vm1393, %v1392, %v1390
          %s1396 = sld [smem:[#allocation4 + $0x30]]
          %s1397 = sld [smem:[#allocation4 + $0x61]]
          %v1398 = vstv %s1396
          %v1399 = vstv %s1397
          %v1400 = vsel %vm505, %v1398, %v1399
          %v1401 = vmul.f32 %v1394, %v1400
          %v1402 = vmul.f32 %v1395, %v1400
          %v1403 = vadd.f32 %v1371, %v1401
          %v1404 = vadd.f32 %v1372, %v1402
          %s1405 = scalar_lea.vmem [#allocation8], 21
          %v1406 = vld [vmem:[%s1405] ss:$8 sm:$0x3]
          %vm1407 = vcmp.ne.f32.partialorder %v1406, 0.0
          %v1408 = vadd.f32 %v1403, %v1387
          %v1409 = vadd.f32 %v1404, %v1388
          %v1410 = vsel %vm1407, 1, 0
          %v1411 = vlaneseq
          %v1412 = vshrl.u32 %v1411, 7
          %v1413 = vsub.s32 0, %v1412
          %v1414 = vrot.slane %v1410, %v1413
          %v1415 = vlaneseq
          %v1416 = vshrl.u32 %v1415, 7
          %v1417 = vsub.s32 1, %v1416
          %v1418 = vrot.slane %v1410, %v1417
          %vm1419 = vcmp.eq.s32.totalorder %v1414, 1
          %vm1420 = vcmp.eq.s32.totalorder %v1418, 1
          %v1421 = vsel %vm1419, %v1408, 0.0
          %v1422 = vsel %vm1420, %v1409, 0.0
          %v1423 = vadd.f32 %v1291, %v1421
          %v1424 = vadd.f32 %v1292, %v1422
          %v1427 = vrot.slane %v1423, 1
          %v1428 = vrot.slane %v1424, 1
          %v1431 = vadd.f32 %v1423, %v1427
          %v1432 = vadd.f32 %v1424, %v1428
          %v1433 = vxor.u32 %v1431, 2147483648
          %v1434 = vxor.u32 %v1432, 2147483648
          %v1435 = vmul.f32 %v1433, 1.442695
          %v1436 = vpow.pop %v1435
          %v1437 = vmul.f32 %v1434, 1.442695
          %v1438 = vpow.pop %v1437
          %v1439 = vadd.f32 %v1436, 1.0
          %v1440 = vadd.f32 %v1438, 1.0
          %v1441 = vrcp.pop %v1439
          %v1442 = vmul.f32 1.0, %v1441
          %v1443 = vrcp.pop %v1440
          %v1444 = vmul.f32 1.0, %v1443
          %v1447 = vcombine.low %v1442, %v1444
          %v1449 = vunpack.c.l.s4 1966171168
          %v1450 = vunpack.c.0.s8 %v1449
          %v1451 = vlaneseq
          %v1452 = vshrl.u32 %v1451, 7
          %v1453 = vsub.s32 %v1450, %v1452
          %v1454 = vrot.slane %v1447, %v1453
          %v1456 = vunpack.c.l.s4 1966171168
          %v1457 = vunpack.c.0.s8 %v1456
          %v1458 = vlaneseq
          %v1459 = vshrl.u32 %v1458, 7
          %v1460 = vsub.s32 %v1457, %v1459
          %v1461 = vrot.slane %v1454, %v1460
          %v1463 = vlaneseq
          %vm1464 = vcmp.ge.s32.totalorder %v1463, 0
          %vm1465 = vcmp.lt.s32.totalorder %v1463, 256
          %vm1466 = vmand %vm1464, %vm1465
          %1467 = vst.msk [vmem:[%s232] sm:$0x3] %vm1466, %v1461
        $region56: #{tpu_custom_call.1} parent=31 // pred_fallthru
          _
        %s1468 = sand.u32 %s112, 1
        %s1469 = scalar_lea.sflag [#allocation6], %s1468
        %s1470 = sand.u32 %s112, 1
        %s1471 = smul.addr %s1470, 2
        %s1472 = scalar_lea.vmem [#allocation11], %s1471
        // Predicated region
        $region57: #{tpu_custom_call.1} parent=31 // pred_check
          %p1473 = pneg %p122
        $region58: #{tpu_custom_call.1} parent=31 // pred_check_branch
          %1475 = sbr.rel (%p1473) target = $region60
        $region59: #{tpu_custom_call.1} parent=31 // pred_region
          %s1477 = ssub.s32 32, 32
          %1478 = vsyncadd %s1469, %s1477
          %s1479 = smul.addr %s26, 2
          %s1480 = smul.addr %s1479, 16
          %s1481 = scalar_lea.hbm %s3, %s1480
          %s1483 = sshll.u32 %s1472, 4
          %s1484 = int_to_ptr.vmem [resolvable:$true] %s1483
          %1486 = dma.vmem_to_hbm [thread:$0]  %s1484, 32, %s1481, %s1469
        $region60: #{tpu_custom_call.1} parent=31 // pred_fallthru
          _
      $region32: #{tpu_custom_call.1} parent=5 // pred_fallthru
        _
      %p1487 = scmp.le.s32.totalorder 2, %s17
      // Predicated region
      $region61: #{tpu_custom_call.1} parent=5 // pred_check
        %p1488 = pneg %p1487
      $region62: #{tpu_custom_call.1} parent=5 // pred_check_branch
        %1490 = sbr.rel (%p1488) target = $region64
      $region63: #{tpu_custom_call.1} parent=5 // pred_region
        %s1491 = ssub.s32 %s17, 2
        // Predicated region
        $region65: #{tpu_custom_call.1} parent=63 // pred_check
          %p1492 = pneg %p128
        $region66: #{tpu_custom_call.1} parent=63 // pred_check_branch
          %1494 = sbr.rel (%p1492) target = $region68
        $region67: #{tpu_custom_call.1} parent=63 // pred_region
          %s1495 = sand.u32 %s113, 1
          %s1496 = scalar_lea.sflag [#allocation6], %s1495
          %s1497 = sand.u32 %s113, 1
          %s1498 = smul.addr %s1497, 2
          %s1499 = scalar_lea.vmem [#allocation11], %s1498
          %1500 = dma.done %s1496, 32
        $region68: #{tpu_custom_call.1} parent=63 // pred_fallthru
          _
      $region64: #{tpu_custom_call.1} parent=5 // pred_fallthru
        _
    $region6: #{tpu_custom_call.1} parent=1 // loop_footer
      %s21 = sadd.s32 1, %s17
    $region7: #{tpu_custom_call.1} parent=1 // loop_footer_branch
      %16 = sbr.rel target = $region3
    $region8: #{tpu_custom_call.1} parent=1 // loop_exit
      _
    %1501 = vsyncpa [#allocation5], 1
    %s1502 = scalar_lea.sflag [#allocation5], 1
    %1503 = vsyncpa %s1502, 1
    %1504 = vsyncpa [#allocation10], 1
    %s1505 = scalar_lea.sflag [#allocation10], 1
    %1506 = vsyncpa %s1505, 1
    %1507 = vsyncpa [#allocation6], 1
    %s1508 = scalar_lea.sflag [#allocation6], 1
    %1509 = vsyncpa %s1508, 1
    %1510 = vsyncpa [#allocation7], 1
    %s1511 = scalar_lea.sflag [#allocation7], 1
    %1512 = vsyncpa %s1511, 1

</llo_original>
